<compile_context>
chip_gen: v7x
topology: tpu7x:2x2x1
jax: 0.10.0
libtpu: 0.0.40
codegen_flags: <defaults>
</compile_context>

<pallas_src>
import functools

import jax
import jax.numpy as jnp
from jax.experimental import pallas as pl
from jax.experimental.pallas import tpu as pltpu

VMEM_SPEC = pl.BlockSpec(memory_space=pltpu.MemorySpace.VMEM)
BN_EPS = 1e-5
LEAKY_SLOPE = 0.2  # GATConv default negative_slope


# ----------------------------------------------------------------------------
# Fused forward kernel: [GATLayerWithSkip + BN + ELU] * L  ->  [Linear (+ELU) + BN] * K
# ----------------------------------------------------------------------------
def fused_forward_kernel(*refs, gat_plan, fc_plan, heads):
    x_ref, adj_ref, vec_ref = refs[0], refs[1], refs[2]
    mat_refs = refs[3:-1]
    out_ref = refs[-1]

    n = x_ref.shape[0]
    adj = adj_ref[...].astype(jnp.float32)      # (N, N) loaded once, reused by every GAT layer
    h = x_ref[...].astype(jnp.float32)          # current activations, f32

    def vec(row, width):                        # (1, width) slice of the packed param table
        return vec_ref[row:row + 1, :width]

    # ---- GAT + skip + (folded) BN + ELU stack ----
    for lp in gat_plan:
        d = lp["out_dim"]
        w = mat_refs[lp["w"]][...]                                     # (Fin, heads*d) bf16
        xp_all = jnp.dot(h.astype(jnp.bfloat16), w,
                         preferred_element_type=jnp.float32)           # (N, heads*d) one wide MXU push
        src_prod = xp_all * vec(lp["a_src"], heads * d)                # VPU
        dst_prod = xp_all * vec(lp["a_dst"], heads * d)

        acc = jnp.zeros((n, d), jnp.float32)
        for hh in range(heads):                                        # static unroll
            sl = slice(hh * d, (hh + 1) * d)
            xp = xp_all[:, sl]                                         # (N, d)
            a_s = jnp.sum(src_prod[:, sl], axis=-1, keepdims=True)     # (N, 1) XLU reduce
            a_d = jnp.sum(dst_prod[:, sl], axis=-1, keepdims=True)     # (N, 1)
            e = a_d + jnp.transpose(a_s)                               # e[i, j] = a_dst[i] + a_src[j]
            e = jnp.where(e > 0, e, LEAKY_SLOPE * e)                   # LeakyReLU(0.2)
            e = e - jnp.max(e, axis=-1, keepdims=True)                 # shift-invariant softmax shift
            p = jnp.exp(e) * adj                                       # zero off-graph entries
            denom = jnp.sum(p, axis=-1, keepdims=True)                 # > 0 thanks to self-loops
            attn = p * pl.reciprocal(denom, approx=True)
            acc = acc + jnp.dot(attn.astype(jnp.bfloat16), xp.astype(jnp.bfloat16),
                                preferred_element_type=jnp.float32)

        # concat=False -> mean over heads; BN(eval) folded: y*scale + shift
        y = acc * vec(lp["acc_scale"], d) + vec(lp["bias"], d)
        if lp["res_w"] is not None:
            resw = mat_refs[lp["res_w"]][...]                          # BN scale pre-folded into resw
            y = y + jnp.dot(h.astype(jnp.bfloat16), resw,
                            preferred_element_type=jnp.float32)
        else:
            y = y + h * vec(lp["id_scale"], d)                         # identity skip * BN scale
        h = jnp.where(y > 0, y, jnp.exp(y) - 1.0)                      # ELU
        # TODO(synk): F.dropout(p=0.3) is identity in eval mode; training-mode dropout not implemented.

    # ---- fc head: Linear [-> ELU] -> BN (folded); each BN output is collected ----
    out_ref[...] = jnp.zeros(out_ref.shape, out_ref.dtype)
    for k, fp in enumerate(fc_plan):
        d = fp["out_dim"]
        w = mat_refs[fp["w"]][...]
        y = jnp.dot(h.astype(jnp.bfloat16), w,
                    preferred_element_type=jnp.float32) + vec(fp["bias"], d)
        if fp["apply_elu"]:
            y = jnp.where(y > 0, y, jnp.exp(y) - 1.0)
            y = y * vec(fp["scale"], d) + vec(fp["shift"], d)
        # (when no ELU precedes the BN, BN is fully folded into w/bias on the host)
        out_ref[:, k * 128:k * 128 + d] = y                            # lane-block aligned slot
        h = y


# ----------------------------------------------------------------------------
# Host-side parameter preparation: fold eval-mode BN, pack vectors, cast matrices to bf16
# ----------------------------------------------------------------------------
def build_plan(params, heads):
    vec_rows, mats = [], []

    def add_vec(v):
        vec_rows.append(jnp.asarray(v, jnp.float32).reshape(-1))
        return len(vec_rows) - 1

    def add_mat(m):
        mats.append(jnp.asarray(m, jnp.bfloat16))
        return len(mats) - 1

    gat_plan = []
    for p in params["gat"]:
        d = int(p["bias"].shape[-1])
        scale = p["gamma"] * jax.lax.rsqrt(p["var"] + BN_EPS)          # eval-mode BN folded on host
        shift = p["beta"] - p["mean"] * scale
        bias_comb = p["bias"] * scale + shift
        lp = {
            "out_dim": d,
            "w": add_mat(p["w"]),
            "a_src": add_vec(p["a_src"]),                              # (heads, d) flattened head-major
            "a_dst": add_vec(p["a_dst"]),
            "acc_scale": add_vec(scale / heads),
        }
        if "res_w" in p:
            lp["res_w"] = add_mat(p["res_w"] * scale)                  # fold BN scale into res projection
            bias_comb = bias_comb + p["res_b"] * scale
            lp["id_scale"] = None
        else:
            lp["res_w"] = None
            lp["id_scale"] = add_vec(scale)
        lp["bias"] = add_vec(bias_comb)
        gat_plan.append(lp)

    fc_plan = []
    for k, p in enumerate(params["fc"]):
        d = int(p["w"].shape[1])
        scale = p["gamma"] * jax.lax.rsqrt(p["var"] + BN_EPS)
        shift = p["beta"] - p["mean"] * scale
        if k == 0:
            # Linear -> BN with no ELU in between: fold BN fully into the Linear.
            fp = {"out_dim": d, "apply_elu": False,
                  "w": add_mat(p["w"] * scale),
                  "bias": add_vec(p["b"] * scale + shift),
                  "scale": None, "shift": None}
        else:
            fp = {"out_dim": d, "apply_elu": True,
                  "w": add_mat(p["w"]),
                  "bias": add_vec(p["b"]),
                  "scale": add_vec(scale), "shift": add_vec(shift)}
        fc_plan.append(fp)

    maxw = max(int(v.shape[0]) for v in vec_rows)
    vw = max(128, ((maxw + 127) // 128) * 128)
    table = jnp.zeros((len(vec_rows), vw), jnp.float32)
    for i, v in enumerate(vec_rows):
        table = table.at[i, :v.shape[0]].set(v)
    return gat_plan, fc_plan, table, mats


# ----------------------------------------------------------------------------
# Full forward: one pallas_call for the whole network
# ----------------------------------------------------------------------------
def mincut_pooling_forward(x, adj, params, *, heads):
    gat_plan, fc_plan, vec_table, mats = build_plan(params, heads)
    n = x.shape[0]
    out_dims = [fp["out_dim"] for fp in fc_plan]
    assert all(d <= 128 for d in out_dims)
    slab_width = 128 * len(out_dims)

    kernel = functools.partial(fused_forward_kernel,
                               gat_plan=gat_plan, fc_plan=fc_plan, heads=heads)
    inputs = [x.astype(jnp.bfloat16), adj.astype(jnp.bfloat16), vec_table] + mats
    slab = pl.pallas_call(
        kernel,
        out_shape=jax.ShapeDtypeStruct((n, slab_width), jnp.float32),
        in_specs=[VMEM_SPEC] * len(inputs),
        out_specs=VMEM_SPEC,
    )(*inputs)
    # TODO(synk): for large N, grid over dst-row tiles of adj (BlockSpec((tile, N), ...)),
    # mark that axis "parallel" and size the tile per generation (v7x: 64 MiB VMEM, 2 TCs).
    return [slab[:, k * 128:k * 128 + d] for k, d in enumerate(out_dims)]


# ----------------------------------------------------------------------------
# Deterministic parameter init (synthetic, mirrors module __init__ shapes)
# ----------------------------------------------------------------------------
def init_params(key, in_dim, hidden_dims, out_dims, heads):
    params = {"gat": [], "fc": []}
    prev = in_dim
    for hd in hidden_dims:
        key, *ks = jax.random.split(key, 11)
        p = {
            "w": 0.1 * jax.random.normal(ks[0], (prev, heads * hd), jnp.float32),
            "a_src": 0.1 * jax.random.normal(ks[1], (heads, hd), jnp.float32),
            "a_dst": 0.1 * jax.random.normal(ks[2], (heads, hd), jnp.float32),
            "bias": 0.1 * jax.random.normal(ks[3], (1, hd), jnp.float32),
            "gamma": 1.0 + 0.1 * jax.random.normal(ks[4], (1, hd), jnp.float32),
            "beta": 0.1 * jax.random.normal(ks[5], (1, hd), jnp.float32),
            "mean": 0.05 * jax.random.normal(ks[6], (1, hd), jnp.float32),
            "var": jax.random.uniform(ks[7], (1, hd), jnp.float32, 0.5, 1.5),
        }
        if prev != hd:  # res_proj only when in_dim != out_dim
            p["res_w"] = 0.1 * jax.random.normal(ks[8], (prev, hd), jnp.float32)
            p["res_b"] = 0.1 * jax.random.normal(ks[9], (1, hd), jnp.float32)
        params["gat"].append(p)
        prev = hd
    for od in out_dims:
        key, *ks = jax.random.split(key, 9)
        params["fc"].append({
            "w": 0.1 * jax.random.normal(ks[0], (prev, od), jnp.float32),
            "b": 0.1 * jax.random.normal(ks[1], (1, od), jnp.float32),
            "gamma": 1.0 + 0.1 * jax.random.normal(ks[2], (1, od), jnp.float32),
            "beta": 0.1 * jax.random.normal(ks[3], (1, od), jnp.float32),
            "mean": 0.05 * jax.random.normal(ks[4], (1, od), jnp.float32),
            "var": jax.random.uniform(ks[5], (1, od), jnp.float32, 0.5, 1.5),
        })
        prev = od
    return params


# ----------------------------------------------------------------------------
# Pure-JAX f32 reference (module-faithful math) for correctness check
# ----------------------------------------------------------------------------
def reference_forward(x, adj, params, *, heads):
    def elu(v):
        return jnp.where(v > 0, v, jnp.exp(v) - 1.0)

    def bn(v, p):
        return (v - p["mean"]) / jnp.sqrt(p["var"] + BN_EPS) * p["gamma"] + p["beta"]

    for p in params["gat"]:
        n = x.shape[0]
        d = p["bias"].shape[-1]
        acc = jnp.zeros((n, d), jnp.float32)
        for h in range(heads):
            wh = p["w"][:, h * d:(h + 1) * d]
            xp = x @ wh
            a_s = xp @ p["a_src"][h]
            a_d = xp @ p["a_dst"][h]
            e = a_d[:, None] + a_s[None, :]
            e = jnp.where(e > 0, e, LEAKY_SLOPE * e)
            e = jnp.where(adj > 0, e, -1e30)
            e = e - e.max(axis=-1, keepdims=True)
            w = jnp.exp(e) * adj
            attn = w / w.sum(axis=-1, keepdims=True)
            acc = acc + attn @ xp
        y = acc / heads + p["bias"]
        ident = (x @ p["res_w"] + p["res_b"]) if "res_w" in p else x
        x = elu(bn(y + ident, p))
    outs = []
    for k, p in enumerate(params["fc"]):
        y = x @ p["w"] + p["b"]
        if k > 0:
            y = elu(y)
        y = bn(y, p)
        outs.append(y)
        x = y
    return outs


if __name__ == "__main__":
    # Small, module-consistent shapes
    N = 64            # number of graph nodes
    IN_DIM = 16
    HIDDEN_DIMS = [32, 32]   # first layer exercises res_proj, second exercises identity skip
    OUT_DIMS = [8, 4]        # microenvironment zone resolutions
    HEADS = 2
    NUM_EDGES = 256

    key = jax.random.PRNGKey(0)
    kx, ksrc, kdst, kparams = jax.random.split(key, 4)

    x = jax.random.normal(kx, (N, IN_DIM), jnp.float32)

    # edge_index (2, E) with edge_index[0]=src, edge_index[1]=dst, as in PyG
    src = jax.random.randint(ksrc, (NUM_EDGES,), 0, N)
    dst = jax.random.randint(kdst, (NUM_EDGES,), 0, N)
    edge_index = jnp.stack([src, dst])

    # dense adjacency mask: adj[dst, src] = 1, plus self-loops (GATConv add_self_loops=True).
    # NOTE: dense representation deduplicates multi-edges.
    adj = jnp.zeros((N, N), jnp.float32).at[edge_index[1], edge_index[0]].set(1.0)
    adj = jnp.maximum(adj, jnp.eye(N, dtype=jnp.float32))

    params = init_params(kparams, IN_DIM, HIDDEN_DIMS, OUT_DIMS, HEADS)

    outs = mincut_pooling_forward(x, adj, params, heads=HEADS)
    outs = [jax.block_until_ready(o) for o in outs]

    refs = reference_forward(x, adj, params, heads=HEADS)
    # Tolerance accounts for bf16 MXU operands + approx reciprocal vs. the f32 reference.
    for o, r in zip(outs, refs):
        assert o.shape == r.shape and o.dtype == jnp.float32
        assert jnp.allclose(o, r, rtol=3e-2, atol=3e-2), "mismatch vs reference"

    print("KERNEL_OK")
</pallas_src>

<mosaic_0001>
module attributes {stable_mosaic.version = 11 : i64} {
  func.func @fused_forward_kernel(%arg0: memref<64x16xbf16, #tpu.memory_space<vmem>>, %arg1: memref<64x64xbf16, #tpu.memory_space<vmem>>, %arg2: memref<13x128xf32, #tpu.memory_space<vmem>>, %arg3: memref<16x64xbf16, #tpu.memory_space<vmem>>, %arg4: memref<16x32xbf16, #tpu.memory_space<vmem>>, %arg5: memref<32x64xbf16, #tpu.memory_space<vmem>>, %arg6: memref<32x8xbf16, #tpu.memory_space<vmem>>, %arg7: memref<8x4xbf16, #tpu.memory_space<vmem>>, %arg8: memref<64x256xf32, #tpu.memory_space<vmem>>) attributes {dimension_semantics = [], scalar_prefetch = 0 : i64, scratch_operands = 0 : i64, tpu.core_type = #tpu.core_type<tc>} {
    %c0 = arith.constant 0 : index
    %c0_0 = arith.constant 0 : index
    %0 = vector.load %arg1[%c0, %c0_0] : memref<64x64xbf16, #tpu.memory_space<vmem>>, vector<64x64xbf16>
    %1 = arith.extf %0 : vector<64x64xbf16> to vector<64x64xf32>
    %c0_1 = arith.constant 0 : index
    %c0_2 = arith.constant 0 : index
    %2 = vector.load %arg0[%c0_1, %c0_2] : memref<64x16xbf16, #tpu.memory_space<vmem>>, vector<64x16xbf16>
    %3 = arith.extf %2 : vector<64x16xbf16> to vector<64x16xf32>
    %c0_3 = arith.constant 0 : index
    %c0_4 = arith.constant 0 : index
    %4 = vector.load %arg3[%c0_3, %c0_4] : memref<16x64xbf16, #tpu.memory_space<vmem>>, vector<16x64xbf16>
    %5 = arith.truncf %3 : vector<64x16xf32> to vector<64x16xbf16>
    %cst = arith.constant dense<0.000000e+00> : vector<64x64xf32>
    %6 = tpu.matmul %5, %4, %cst {dimension_numbers = #tpu.dot_dimension_numbers<[1], [0], [0], [1], [0, 0, 1, 1], [], []>} : vector<64x16xbf16>, vector<16x64xbf16>, vector<64x64xf32> -> vector<64x64xf32>
    %c0_5 = arith.constant 0 : index
    %c0_6 = arith.constant 0 : index
    %7 = vector.load %arg2[%c0_5, %c0_6] : memref<13x128xf32, #tpu.memory_space<vmem>>, vector<1x64xf32>
    %8 = vector.broadcast %7 : vector<1x64xf32> to vector<64x64xf32>
    %9 = arith.mulf %6, %8 : vector<64x64xf32>
    %c1 = arith.constant 1 : index
    %c0_7 = arith.constant 0 : index
    %10 = vector.load %arg2[%c1, %c0_7] : memref<13x128xf32, #tpu.memory_space<vmem>>, vector<1x64xf32>
    %11 = vector.broadcast %10 : vector<1x64xf32> to vector<64x64xf32>
    %12 = arith.mulf %6, %11 : vector<64x64xf32>
    %cst_8 = arith.constant 0.000000e+00 : f32
    %13 = vector.broadcast %cst_8 : f32 to vector<64x32xf32>
    %14 = vector.extract_strided_slice %6 {offsets = [0, 0], sizes = [64, 32], strides = [1, 1]} : vector<64x64xf32> to vector<64x32xf32>
    %15 = vector.extract_strided_slice %9 {offsets = [0, 0], sizes = [64, 32], strides = [1, 1]} : vector<64x64xf32> to vector<64x32xf32>
    %cst_9 = arith.constant dense<0.000000e+00> : vector<64xf32>
    %16 = vector.multi_reduction <add>, %15, %cst_9 [1] : vector<64x32xf32> to vector<64xf32>
    %17 = vector.shape_cast %16 : vector<64xf32> to vector<64x1xf32>
    %18 = vector.extract_strided_slice %12 {offsets = [0, 0], sizes = [64, 32], strides = [1, 1]} : vector<64x64xf32> to vector<64x32xf32>
    %cst_10 = arith.constant dense<0.000000e+00> : vector<64xf32>
    %19 = vector.multi_reduction <add>, %18, %cst_10 [1] : vector<64x32xf32> to vector<64xf32>
    %20 = vector.shape_cast %19 : vector<64xf32> to vector<64x1xf32>
    %21 = tpu.transpose %17, [1, 0] : vector<64x1xf32> -> vector<1x64xf32>
    %22 = vector.broadcast %20 : vector<64x1xf32> to vector<64x64xf32>
    %23 = vector.broadcast %21 : vector<1x64xf32> to vector<64x64xf32>
    %24 = arith.addf %22, %23 : vector<64x64xf32>
    %cst_11 = arith.constant 0.000000e+00 : f32
    %25 = vector.broadcast %cst_11 : f32 to vector<64x64xf32>
    %26 = arith.cmpf ogt, %24, %25 : vector<64x64xf32>
    %cst_12 = arith.constant 2.000000e-01 : f32
    %27 = vector.broadcast %cst_12 : f32 to vector<64x64xf32>
    %28 = arith.mulf %27, %24 : vector<64x64xf32>
    %29 = arith.select %26, %24, %28 : vector<64x64xi1>, vector<64x64xf32>
    %cst_13 = arith.constant dense<0xFF800000> : vector<64xf32>
    %30 = vector.multi_reduction <maximumf>, %29, %cst_13 [1] : vector<64x64xf32> to vector<64xf32>
    %31 = vector.shape_cast %30 : vector<64xf32> to vector<64x1xf32>
    %32 = vector.broadcast %31 : vector<64x1xf32> to vector<64x64xf32>
    %33 = arith.subf %29, %32 : vector<64x64xf32>
    %34 = math.exp %33 : vector<64x64xf32>
    %35 = arith.mulf %34, %1 : vector<64x64xf32>
    %cst_14 = arith.constant dense<0.000000e+00> : vector<64xf32>
    %36 = vector.multi_reduction <add>, %35, %cst_14 [1] : vector<64x64xf32> to vector<64xf32>
    %37 = vector.shape_cast %36 : vector<64xf32> to vector<64x1xf32>
    %38 = tpu.reciprocal %37 {approx = true} : vector<64x1xf32> -> vector<64x1xf32>
    %39 = vector.broadcast %38 : vector<64x1xf32> to vector<64x64xf32>
    %40 = arith.mulf %35, %39 : vector<64x64xf32>
    %41 = arith.truncf %40 : vector<64x64xf32> to vector<64x64xbf16>
    %42 = arith.truncf %14 : vector<64x32xf32> to vector<64x32xbf16>
    %cst_15 = arith.constant dense<0.000000e+00> : vector<64x32xf32>
    %43 = tpu.matmul %41, %42, %cst_15 {dimension_numbers = #tpu.dot_dimension_numbers<[1], [0], [0], [1], [0, 0, 1, 1], [], []>} : vector<64x64xbf16>, vector<64x32xbf16>, vector<64x32xf32> -> vector<64x32xf32>
    %44 = arith.addf %13, %43 : vector<64x32xf32>
    %45 = vector.extract_strided_slice %6 {offsets = [0, 32], sizes = [64, 32], strides = [1, 1]} : vector<64x64xf32> to vector<64x32xf32>
    %46 = vector.extract_strided_slice %9 {offsets = [0, 32], sizes = [64, 32], strides = [1, 1]} : vector<64x64xf32> to vector<64x32xf32>
    %cst_16 = arith.constant dense<0.000000e+00> : vector<64xf32>
    %47 = vector.multi_reduction <add>, %46, %cst_16 [1] : vector<64x32xf32> to vector<64xf32>
    %48 = vector.shape_cast %47 : vector<64xf32> to vector<64x1xf32>
    %49 = vector.extract_strided_slice %12 {offsets = [0, 32], sizes = [64, 32], strides = [1, 1]} : vector<64x64xf32> to vector<64x32xf32>
    %cst_17 = arith.constant dense<0.000000e+00> : vector<64xf32>
    %50 = vector.multi_reduction <add>, %49, %cst_17 [1] : vector<64x32xf32> to vector<64xf32>
    %51 = vector.shape_cast %50 : vector<64xf32> to vector<64x1xf32>
    %52 = tpu.transpose %48, [1, 0] : vector<64x1xf32> -> vector<1x64xf32>
    %53 = vector.broadcast %51 : vector<64x1xf32> to vector<64x64xf32>
    %54 = vector.broadcast %52 : vector<1x64xf32> to vector<64x64xf32>
    %55 = arith.addf %53, %54 : vector<64x64xf32>
    %cst_18 = arith.constant 0.000000e+00 : f32
    %56 = vector.broadcast %cst_18 : f32 to vector<64x64xf32>
    %57 = arith.cmpf ogt, %55, %56 : vector<64x64xf32>
    %cst_19 = arith.constant 2.000000e-01 : f32
    %58 = vector.broadcast %cst_19 : f32 to vector<64x64xf32>
    %59 = arith.mulf %58, %55 : vector<64x64xf32>
    %60 = arith.select %57, %55, %59 : vector<64x64xi1>, vector<64x64xf32>
    %cst_20 = arith.constant dense<0xFF800000> : vector<64xf32>
    %61 = vector.multi_reduction <maximumf>, %60, %cst_20 [1] : vector<64x64xf32> to vector<64xf32>
    %62 = vector.shape_cast %61 : vector<64xf32> to vector<64x1xf32>
    %63 = vector.broadcast %62 : vector<64x1xf32> to vector<64x64xf32>
    %64 = arith.subf %60, %63 : vector<64x64xf32>
    %65 = math.exp %64 : vector<64x64xf32>
    %66 = arith.mulf %65, %1 : vector<64x64xf32>
    %cst_21 = arith.constant dense<0.000000e+00> : vector<64xf32>
    %67 = vector.multi_reduction <add>, %66, %cst_21 [1] : vector<64x64xf32> to vector<64xf32>
    %68 = vector.shape_cast %67 : vector<64xf32> to vector<64x1xf32>
    %69 = tpu.reciprocal %68 {approx = true} : vector<64x1xf32> -> vector<64x1xf32>
    %70 = vector.broadcast %69 : vector<64x1xf32> to vector<64x64xf32>
    %71 = arith.mulf %66, %70 : vector<64x64xf32>
    %72 = arith.truncf %71 : vector<64x64xf32> to vector<64x64xbf16>
    %73 = arith.truncf %45 : vector<64x32xf32> to vector<64x32xbf16>
    %cst_22 = arith.constant dense<0.000000e+00> : vector<64x32xf32>
    %74 = tpu.matmul %72, %73, %cst_22 {dimension_numbers = #tpu.dot_dimension_numbers<[1], [0], [0], [1], [0, 0, 1, 1], [], []>} : vector<64x64xbf16>, vector<64x32xbf16>, vector<64x32xf32> -> vector<64x32xf32>
    %75 = arith.addf %44, %74 : vector<64x32xf32>
    %c2 = arith.constant 2 : index
    %c0_23 = arith.constant 0 : index
    %76 = vector.load %arg2[%c2, %c0_23] : memref<13x128xf32, #tpu.memory_space<vmem>>, vector<1x32xf32>
    %77 = vector.broadcast %76 : vector<1x32xf32> to vector<64x32xf32>
    %78 = arith.mulf %75, %77 : vector<64x32xf32>
    %c3 = arith.constant 3 : index
    %c0_24 = arith.constant 0 : index
    %79 = vector.load %arg2[%c3, %c0_24] : memref<13x128xf32, #tpu.memory_space<vmem>>, vector<1x32xf32>
    %80 = vector.broadcast %79 : vector<1x32xf32> to vector<64x32xf32>
    %81 = arith.addf %78, %80 : vector<64x32xf32>
    %c0_25 = arith.constant 0 : index
    %c0_26 = arith.constant 0 : index
    %82 = vector.load %arg4[%c0_25, %c0_26] : memref<16x32xbf16, #tpu.memory_space<vmem>>, vector<16x32xbf16>
    %83 = arith.truncf %3 : vector<64x16xf32> to vector<64x16xbf16>
    %cst_27 = arith.constant dense<0.000000e+00> : vector<64x32xf32>
    %84 = tpu.matmul %83, %82, %cst_27 {dimension_numbers = #tpu.dot_dimension_numbers<[1], [0], [0], [1], [0, 0, 1, 1], [], []>} : vector<64x16xbf16>, vector<16x32xbf16>, vector<64x32xf32> -> vector<64x32xf32>
    %85 = arith.addf %81, %84 : vector<64x32xf32>
    %cst_28 = arith.constant 0.000000e+00 : f32
    %86 = vector.broadcast %cst_28 : f32 to vector<64x32xf32>
    %87 = arith.cmpf ogt, %85, %86 : vector<64x32xf32>
    %88 = math.exp %85 : vector<64x32xf32>
    %cst_29 = arith.constant 1.000000e+00 : f32
    %89 = vector.broadcast %cst_29 : f32 to vector<64x32xf32>
    %90 = arith.subf %88, %89 : vector<64x32xf32>
    %91 = arith.select %87, %85, %90 : vector<64x32xi1>, vector<64x32xf32>
    %c0_30 = arith.constant 0 : index
    %c0_31 = arith.constant 0 : index
    %92 = vector.load %arg5[%c0_30, %c0_31] : memref<32x64xbf16, #tpu.memory_space<vmem>>, vector<32x64xbf16>
    %93 = arith.truncf %91 : vector<64x32xf32> to vector<64x32xbf16>
    %cst_32 = arith.constant dense<0.000000e+00> : vector<64x64xf32>
    %94 = tpu.matmul %93, %92, %cst_32 {dimension_numbers = #tpu.dot_dimension_numbers<[1], [0], [0], [1], [0, 0, 1, 1], [], []>} : vector<64x32xbf16>, vector<32x64xbf16>, vector<64x64xf32> -> vector<64x64xf32>
    %c4 = arith.constant 4 : index
    %c0_33 = arith.constant 0 : index
    %95 = vector.load %arg2[%c4, %c0_33] : memref<13x128xf32, #tpu.memory_space<vmem>>, vector<1x64xf32>
    %96 = vector.broadcast %95 : vector<1x64xf32> to vector<64x64xf32>
    %97 = arith.mulf %94, %96 : vector<64x64xf32>
    %c5 = arith.constant 5 : index
    %c0_34 = arith.constant 0 : index
    %98 = vector.load %arg2[%c5, %c0_34] : memref<13x128xf32, #tpu.memory_space<vmem>>, vector<1x64xf32>
    %99 = vector.broadcast %98 : vector<1x64xf32> to vector<64x64xf32>
    %100 = arith.mulf %94, %99 : vector<64x64xf32>
    %cst_35 = arith.constant 0.000000e+00 : f32
    %101 = vector.broadcast %cst_35 : f32 to vector<64x32xf32>
    %102 = vector.extract_strided_slice %94 {offsets = [0, 0], sizes = [64, 32], strides = [1, 1]} : vector<64x64xf32> to vector<64x32xf32>
    %103 = vector.extract_strided_slice %97 {offsets = [0, 0], sizes = [64, 32], strides = [1, 1]} : vector<64x64xf32> to vector<64x32xf32>
    %cst_36 = arith.constant dense<0.000000e+00> : vector<64xf32>
    %104 = vector.multi_reduction <add>, %103, %cst_36 [1] : vector<64x32xf32> to vector<64xf32>
    %105 = vector.shape_cast %104 : vector<64xf32> to vector<64x1xf32>
    %106 = vector.extract_strided_slice %100 {offsets = [0, 0], sizes = [64, 32], strides = [1, 1]} : vector<64x64xf32> to vector<64x32xf32>
    %cst_37 = arith.constant dense<0.000000e+00> : vector<64xf32>
    %107 = vector.multi_reduction <add>, %106, %cst_37 [1] : vector<64x32xf32> to vector<64xf32>
    %108 = vector.shape_cast %107 : vector<64xf32> to vector<64x1xf32>
    %109 = tpu.transpose %105, [1, 0] : vector<64x1xf32> -> vector<1x64xf32>
    %110 = vector.broadcast %108 : vector<64x1xf32> to vector<64x64xf32>
    %111 = vector.broadcast %109 : vector<1x64xf32> to vector<64x64xf32>
    %112 = arith.addf %110, %111 : vector<64x64xf32>
    %cst_38 = arith.constant 0.000000e+00 : f32
    %113 = vector.broadcast %cst_38 : f32 to vector<64x64xf32>
    %114 = arith.cmpf ogt, %112, %113 : vector<64x64xf32>
    %cst_39 = arith.constant 2.000000e-01 : f32
    %115 = vector.broadcast %cst_39 : f32 to vector<64x64xf32>
    %116 = arith.mulf %115, %112 : vector<64x64xf32>
    %117 = arith.select %114, %112, %116 : vector<64x64xi1>, vector<64x64xf32>
    %cst_40 = arith.constant dense<0xFF800000> : vector<64xf32>
    %118 = vector.multi_reduction <maximumf>, %117, %cst_40 [1] : vector<64x64xf32> to vector<64xf32>
    %119 = vector.shape_cast %118 : vector<64xf32> to vector<64x1xf32>
    %120 = vector.broadcast %119 : vector<64x1xf32> to vector<64x64xf32>
    %121 = arith.subf %117, %120 : vector<64x64xf32>
    %122 = math.exp %121 : vector<64x64xf32>
    %123 = arith.mulf %122, %1 : vector<64x64xf32>
    %cst_41 = arith.constant dense<0.000000e+00> : vector<64xf32>
    %124 = vector.multi_reduction <add>, %123, %cst_41 [1] : vector<64x64xf32> to vector<64xf32>
    %125 = vector.shape_cast %124 : vector<64xf32> to vector<64x1xf32>
    %126 = tpu.reciprocal %125 {approx = true} : vector<64x1xf32> -> vector<64x1xf32>
    %127 = vector.broadcast %126 : vector<64x1xf32> to vector<64x64xf32>
    %128 = arith.mulf %123, %127 : vector<64x64xf32>
    %129 = arith.truncf %128 : vector<64x64xf32> to vector<64x64xbf16>
    %130 = arith.truncf %102 : vector<64x32xf32> to vector<64x32xbf16>
    %cst_42 = arith.constant dense<0.000000e+00> : vector<64x32xf32>
    %131 = tpu.matmul %129, %130, %cst_42 {dimension_numbers = #tpu.dot_dimension_numbers<[1], [0], [0], [1], [0, 0, 1, 1], [], []>} : vector<64x64xbf16>, vector<64x32xbf16>, vector<64x32xf32> -> vector<64x32xf32>
    %132 = arith.addf %101, %131 : vector<64x32xf32>
    %133 = vector.extract_strided_slice %94 {offsets = [0, 32], sizes = [64, 32], strides = [1, 1]} : vector<64x64xf32> to vector<64x32xf32>
    %134 = vector.extract_strided_slice %97 {offsets = [0, 32], sizes = [64, 32], strides = [1, 1]} : vector<64x64xf32> to vector<64x32xf32>
    %cst_43 = arith.constant dense<0.000000e+00> : vector<64xf32>
    %135 = vector.multi_reduction <add>, %134, %cst_43 [1] : vector<64x32xf32> to vector<64xf32>
    %136 = vector.shape_cast %135 : vector<64xf32> to vector<64x1xf32>
    %137 = vector.extract_strided_slice %100 {offsets = [0, 32], sizes = [64, 32], strides = [1, 1]} : vector<64x64xf32> to vector<64x32xf32>
    %cst_44 = arith.constant dense<0.000000e+00> : vector<64xf32>
    %138 = vector.multi_reduction <add>, %137, %cst_44 [1] : vector<64x32xf32> to vector<64xf32>
    %139 = vector.shape_cast %138 : vector<64xf32> to vector<64x1xf32>
    %140 = tpu.transpose %136, [1, 0] : vector<64x1xf32> -> vector<1x64xf32>
    %141 = vector.broadcast %139 : vector<64x1xf32> to vector<64x64xf32>
    %142 = vector.broadcast %140 : vector<1x64xf32> to vector<64x64xf32>
    %143 = arith.addf %141, %142 : vector<64x64xf32>
    %cst_45 = arith.constant 0.000000e+00 : f32
    %144 = vector.broadcast %cst_45 : f32 to vector<64x64xf32>
    %145 = arith.cmpf ogt, %143, %144 : vector<64x64xf32>
    %cst_46 = arith.constant 2.000000e-01 : f32
    %146 = vector.broadcast %cst_46 : f32 to vector<64x64xf32>
    %147 = arith.mulf %146, %143 : vector<64x64xf32>
    %148 = arith.select %145, %143, %147 : vector<64x64xi1>, vector<64x64xf32>
    %cst_47 = arith.constant dense<0xFF800000> : vector<64xf32>
    %149 = vector.multi_reduction <maximumf>, %148, %cst_47 [1] : vector<64x64xf32> to vector<64xf32>
    %150 = vector.shape_cast %149 : vector<64xf32> to vector<64x1xf32>
    %151 = vector.broadcast %150 : vector<64x1xf32> to vector<64x64xf32>
    %152 = arith.subf %148, %151 : vector<64x64xf32>
    %153 = math.exp %152 : vector<64x64xf32>
    %154 = arith.mulf %153, %1 : vector<64x64xf32>
    %cst_48 = arith.constant dense<0.000000e+00> : vector<64xf32>
    %155 = vector.multi_reduction <add>, %154, %cst_48 [1] : vector<64x64xf32> to vector<64xf32>
    %156 = vector.shape_cast %155 : vector<64xf32> to vector<64x1xf32>
    %157 = tpu.reciprocal %156 {approx = true} : vector<64x1xf32> -> vector<64x1xf32>
    %158 = vector.broadcast %157 : vector<64x1xf32> to vector<64x64xf32>
    %159 = arith.mulf %154, %158 : vector<64x64xf32>
    %160 = arith.truncf %159 : vector<64x64xf32> to vector<64x64xbf16>
    %161 = arith.truncf %133 : vector<64x32xf32> to vector<64x32xbf16>
    %cst_49 = arith.constant dense<0.000000e+00> : vector<64x32xf32>
    %162 = tpu.matmul %160, %161, %cst_49 {dimension_numbers = #tpu.dot_dimension_numbers<[1], [0], [0], [1], [0, 0, 1, 1], [], []>} : vector<64x64xbf16>, vector<64x32xbf16>, vector<64x32xf32> -> vector<64x32xf32>
    %163 = arith.addf %132, %162 : vector<64x32xf32>
    %c6 = arith.constant 6 : index
    %c0_50 = arith.constant 0 : index
    %164 = vector.load %arg2[%c6, %c0_50] : memref<13x128xf32, #tpu.memory_space<vmem>>, vector<1x32xf32>
    %165 = vector.broadcast %164 : vector<1x32xf32> to vector<64x32xf32>
    %166 = arith.mulf %163, %165 : vector<64x32xf32>
    %c8 = arith.constant 8 : index
    %c0_51 = arith.constant 0 : index
    %167 = vector.load %arg2[%c8, %c0_51] : memref<13x128xf32, #tpu.memory_space<vmem>>, vector<1x32xf32>
    %168 = vector.broadcast %167 : vector<1x32xf32> to vector<64x32xf32>
    %169 = arith.addf %166, %168 : vector<64x32xf32>
    %c7 = arith.constant 7 : index
    %c0_52 = arith.constant 0 : index
    %170 = vector.load %arg2[%c7, %c0_52] : memref<13x128xf32, #tpu.memory_space<vmem>>, vector<1x32xf32>
    %171 = vector.broadcast %170 : vector<1x32xf32> to vector<64x32xf32>
    %172 = arith.mulf %91, %171 : vector<64x32xf32>
    %173 = arith.addf %169, %172 : vector<64x32xf32>
    %cst_53 = arith.constant 0.000000e+00 : f32
    %174 = vector.broadcast %cst_53 : f32 to vector<64x32xf32>
    %175 = arith.cmpf ogt, %173, %174 : vector<64x32xf32>
    %176 = math.exp %173 : vector<64x32xf32>
    %cst_54 = arith.constant 1.000000e+00 : f32
    %177 = vector.broadcast %cst_54 : f32 to vector<64x32xf32>
    %178 = arith.subf %176, %177 : vector<64x32xf32>
    %179 = arith.select %175, %173, %178 : vector<64x32xi1>, vector<64x32xf32>
    %cst_55 = arith.constant 0.000000e+00 : f32
    %180 = vector.broadcast %cst_55 : f32 to vector<64x256xf32>
    %c0_56 = arith.constant 0 : index
    %c0_57 = arith.constant 0 : index
    %181 = vector.load %arg8[%c0_56, %c0_57] : memref<64x256xf32, #tpu.memory_space<vmem>>, vector<64x256xf32>
    tpu.vector_store %arg8[%c0_56, %c0_57], %180 {strides = array<i32>} : memref<64x256xf32, #tpu.memory_space<vmem>>, vector<64x256xf32>,
    %c0_58 = arith.constant 0 : index
    %c0_59 = arith.constant 0 : index
    %182 = vector.load %arg6[%c0_58, %c0_59] : memref<32x8xbf16, #tpu.memory_space<vmem>>, vector<32x8xbf16>
    %183 = arith.truncf %179 : vector<64x32xf32> to vector<64x32xbf16>
    %cst_60 = arith.constant dense<0.000000e+00> : vector<64x8xf32>
    %184 = tpu.matmul %183, %182, %cst_60 {dimension_numbers = #tpu.dot_dimension_numbers<[1], [0], [0], [1], [0, 0, 1, 1], [], []>} : vector<64x32xbf16>, vector<32x8xbf16>, vector<64x8xf32> -> vector<64x8xf32>
    %c9 = arith.constant 9 : index
    %c0_61 = arith.constant 0 : index
    %185 = vector.load %arg2[%c9, %c0_61] : memref<13x128xf32, #tpu.memory_space<vmem>>, vector<1x8xf32>
    %186 = vector.broadcast %185 : vector<1x8xf32> to vector<64x8xf32>
    %187 = arith.addf %184, %186 : vector<64x8xf32>
    %c0_62 = arith.constant 0 : index
    %c0_63 = arith.constant 0 : index
    %188 = vector.load %arg8[%c0_62, %c0_63] : memref<64x256xf32, #tpu.memory_space<vmem>>, vector<64x8xf32>
    tpu.vector_store %arg8[%c0_62, %c0_63], %187 {strides = array<i32>} : memref<64x256xf32, #tpu.memory_space<vmem>>, vector<64x8xf32>,
    %c0_64 = arith.constant 0 : index
    %c0_65 = arith.constant 0 : index
    %189 = vector.load %arg7[%c0_64, %c0_65] : memref<8x4xbf16, #tpu.memory_space<vmem>>, vector<8x4xbf16>
    %190 = arith.truncf %187 : vector<64x8xf32> to vector<64x8xbf16>
    %cst_66 = arith.constant dense<0.000000e+00> : vector<64x4xf32>
    %191 = tpu.matmul %190, %189, %cst_66 {dimension_numbers = #tpu.dot_dimension_numbers<[1], [0], [0], [1], [0, 0, 1, 1], [], []>} : vector<64x8xbf16>, vector<8x4xbf16>, vector<64x4xf32> -> vector<64x4xf32>
    %c10 = arith.constant 10 : index
    %c0_67 = arith.constant 0 : index
    %192 = vector.load %arg2[%c10, %c0_67] : memref<13x128xf32, #tpu.memory_space<vmem>>, vector<1x4xf32>
    %193 = vector.broadcast %192 : vector<1x4xf32> to vector<64x4xf32>
    %194 = arith.addf %191, %193 : vector<64x4xf32>
    %cst_68 = arith.constant 0.000000e+00 : f32
    %195 = vector.broadcast %cst_68 : f32 to vector<64x4xf32>
    %196 = arith.cmpf ogt, %194, %195 : vector<64x4xf32>
    %197 = math.exp %194 : vector<64x4xf32>
    %cst_69 = arith.constant 1.000000e+00 : f32
    %198 = vector.broadcast %cst_69 : f32 to vector<64x4xf32>
    %199 = arith.subf %197, %198 : vector<64x4xf32>
    %200 = arith.select %196, %194, %199 : vector<64x4xi1>, vector<64x4xf32>
    %c11 = arith.constant 11 : index
    %c0_70 = arith.constant 0 : index
    %201 = vector.load %arg2[%c11, %c0_70] : memref<13x128xf32, #tpu.memory_space<vmem>>, vector<1x4xf32>
    %202 = vector.broadcast %201 : vector<1x4xf32> to vector<64x4xf32>
    %203 = arith.mulf %200, %202 : vector<64x4xf32>
    %c12 = arith.constant 12 : index
    %c0_71 = arith.constant 0 : index
    %204 = vector.load %arg2[%c12, %c0_71] : memref<13x128xf32, #tpu.memory_space<vmem>>, vector<1x4xf32>
    %205 = vector.broadcast %204 : vector<1x4xf32> to vector<64x4xf32>
    %206 = arith.addf %203, %205 : vector<64x4xf32>
    %c0_72 = arith.constant 0 : index
    %c128 = arith.constant 128 : index
    %207 = vector.load %arg8[%c0_72, %c128] : memref<64x256xf32, #tpu.memory_space<vmem>>, vector<64x4xf32>
    tpu.vector_store %arg8[%c0_72, %c128], %206 {strides = array<i32>} : memref<64x256xf32, #tpu.memory_space<vmem>>, vector<64x4xf32>,
    return
  }
}

</mosaic_0001>

<llo_original>
// kernel: tpu_custom_call.1
$region0: #{tpu_custom_call.1}
  #allocation0 [shape = 'u32[]', space=smem, size = 0x4, offset = 0x4, fixed_abs, tag = 'smem constant byte address 0x4 - core index']
  #allocation1 [shape = 'u32[144,128]{1,0:T(1,128)}', space=vmem, size = 0x12000, scoped, tag = 'internal scratch']
  %s0 = inlined_call_operand.vmem [shape: bf16[64,16], index: 0, kind: input, shape index: {}]
  %s1 = inlined_call_operand.vmem [shape: bf16[64,64], index: 1, kind: input, shape index: {}]
  %s2 = inlined_call_operand.vmem [shape: f32[13,128], index: 2, kind: input, shape index: {}]
  %s3 = inlined_call_operand.vmem [shape: bf16[16,64], index: 3, kind: input, shape index: {}]
  %s4 = inlined_call_operand.vmem [shape: bf16[16,32], index: 4, kind: input, shape index: {}]
  %s5 = inlined_call_operand.vmem [shape: bf16[32,64], index: 5, kind: input, shape index: {}]
  %s6 = inlined_call_operand.vmem [shape: bf16[32,8], index: 6, kind: input, shape index: {}]
  %s7 = inlined_call_operand.vmem [shape: bf16[8,4], index: 7, kind: input, shape index: {}]
  %s8 = inlined_call_operand.hbm [shape: f32[64,256], index: 8, kind: output, shape index: {}]
  %s9 = sld [smem:[#allocation0]]
  $region42: #{tpu_custom_call.1} parent=0
    _
  %s11 = ssub.s32 1, %s9
  %s12 = scalar_select 0, %s11, %s9
  $region1: #{tpu_custom_call.1} parent=0
    #allocation2 [shape = 'u8[65536]{0}', space=vmem, size = 0x10000, scoped, tag = 'output window, operand 0, single buffered']
    #allocation3 [shape = 's32[1]{0}', space=sflag, size = 0x4, scoped, tag = 'scoped memory for tpu_custom_call.1']
    %13 = vsyncpa [#allocation3], 0
    // Predicated region
    $region2: #{tpu_custom_call.1} parent=1 // pred_check
      _
    $region3: #{tpu_custom_call.1} parent=1 // pred_check_branch
      %15 = sbr.rel (0) target = $region5
    $region4: #{tpu_custom_call.1} parent=1 // pred_region
      _
    $region5: #{tpu_custom_call.1} parent=1 // pred_fallthru
      _
    // Predicated region
    $region6: #{tpu_custom_call.1} parent=1 // pred_check
      _
    $region7: #{tpu_custom_call.1} parent=1 // pred_check_branch
      %17 = sbr.rel (0) target = $region9
    $region8: #{tpu_custom_call.1} parent=1 // pred_region
      _
    $region9: #{tpu_custom_call.1} parent=1 // pred_fallthru
      _
    // Predicated region
    $region10: #{tpu_custom_call.1} parent=1 // pred_check
      _
    $region11: #{tpu_custom_call.1} parent=1 // pred_check_branch
      %19 = sbr.rel (0) target = $region13
    $region12: #{tpu_custom_call.1} parent=1 // pred_region
      _
    $region13: #{tpu_custom_call.1} parent=1 // pred_fallthru
      _
    // Predicated region
    $region14: #{tpu_custom_call.1} parent=1 // pred_check
      _
    $region15: #{tpu_custom_call.1} parent=1 // pred_check_branch
      %21 = sbr.rel (0) target = $region17
    $region16: #{tpu_custom_call.1} parent=1 // pred_region
      _
    $region17: #{tpu_custom_call.1} parent=1 // pred_fallthru
      _
    // Predicated region
    $region18: #{tpu_custom_call.1} parent=1 // pred_check
      _
    $region19: #{tpu_custom_call.1} parent=1 // pred_check_branch
      %23 = sbr.rel (0) target = $region21
    $region20: #{tpu_custom_call.1} parent=1 // pred_region
      _
    $region21: #{tpu_custom_call.1} parent=1 // pred_fallthru
      _
    // Predicated region
    $region22: #{tpu_custom_call.1} parent=1 // pred_check
      _
    $region23: #{tpu_custom_call.1} parent=1 // pred_check_branch
      %25 = sbr.rel (0) target = $region25
    $region24: #{tpu_custom_call.1} parent=1 // pred_region
      _
    $region25: #{tpu_custom_call.1} parent=1 // pred_fallthru
      _
    // Predicated region
    $region26: #{tpu_custom_call.1} parent=1 // pred_check
      _
    $region27: #{tpu_custom_call.1} parent=1 // pred_check_branch
      %27 = sbr.rel (0) target = $region29
    $region28: #{tpu_custom_call.1} parent=1 // pred_region
      _
    $region29: #{tpu_custom_call.1} parent=1 // pred_fallthru
      _
    // Predicated region
    $region30: #{tpu_custom_call.1} parent=1 // pred_check
      _
    $region31: #{tpu_custom_call.1} parent=1 // pred_check_branch
      %29 = sbr.rel (0) target = $region33
    $region32: #{tpu_custom_call.1} parent=1 // pred_region
      _
    $region33: #{tpu_custom_call.1} parent=1 // pred_fallthru
      _
    %v31 = vld [vmem:[%s1] sm:$0xf]
    %v32 = vld [vmem:[%s1 + $0x4] sm:$0xf]
    %v33 = vld [vmem:[%s1 + $0x8] sm:$0xf]
    %v34 = vld [vmem:[%s1 + $0xc] sm:$0xf]
    %v35 = vld [vmem:[%s1 + $0x10] sm:$0xf]
    %v36 = vld [vmem:[%s1 + $0x14] sm:$0xf]
    %v37 = vld [vmem:[%s1 + $0x18] sm:$0xf]
    %v38 = vld [vmem:[%s1 + $0x1c] sm:$0xf]
    %v39 = vunpack.c.l.bf16 %v31
    %v40 = vunpack.c.l.bf16 %v32
    %v41 = vunpack.c.l.bf16 %v33
    %v42 = vunpack.c.l.bf16 %v34
    %v43 = vunpack.c.l.bf16 %v35
    %v44 = vunpack.c.l.bf16 %v36
    %v45 = vunpack.c.l.bf16 %v37
    %v46 = vunpack.c.l.bf16 %v38
    %v47 = vld [vmem:[%s0] sm:$0xf]
    %v48 = vld [vmem:[%s0 + $0x4] sm:$0xf]
    %v49 = vld [vmem:[%s0 + $0x8] sm:$0xf]
    %v50 = vld [vmem:[%s0 + $0xc] sm:$0xf]
    %v51 = vld [vmem:[%s0 + $0x10] sm:$0xf]
    %v52 = vld [vmem:[%s0 + $0x14] sm:$0xf]
    %v53 = vld [vmem:[%s0 + $0x18] sm:$0xf]
    %v54 = vld [vmem:[%s0 + $0x1c] sm:$0xf]
    %v55 = vld [vmem:[%s3] sm:$0xf]
    %v56 = vld [vmem:[%s3 + $0x4] sm:$0xf]
    %v65 = vunpack.c.l.b16 %v47
    %v66 = vunpack.c.l.b16 %v48
    %v67 = vunpack.c.l.b16 %v49
    %v68 = vunpack.c.l.b16 %v50
    %v69 = vunpack.c.l.b16 %v51
    %v70 = vunpack.c.l.b16 %v52
    %v71 = vunpack.c.l.b16 %v53
    %v72 = vunpack.c.l.b16 %v54
    %v73 = vpack.c.b16 %v66, %v65
    %v74 = vpack.c.b16 %v68, %v67
    %v75 = vpack.c.b16 %v70, %v69
    %v76 = vpack.c.b16 %v72, %v71
    %v79 = vunpack.c.l.b16 %v55
    %v80 = vunpack.c.l.b16 %v56
    %v81 = vpack.c.b16 %v80, %v79
    %vm83 = vcmask 130048
    %v85 = vsel %vm83, %v73, 0
    %v88 = vsel %vm83, %v74, 0
    %v91 = vsel %vm83, %v75, 0
    %v94 = vsel %vm83, %v76, 0
    %96 = vmatprep.subr.bf16.mxu0 0
    %97 = vmatpush1.bf16.msra.mxu0 %v81
    %98 = vmatprep.subr.bf16.mxu0 0
    %99 = vmatpush1.bf16.msra.mxu0 0
    %100 = vmatprep.subr.bf16.mxu0 0
    %101 = vmatpush1.bf16.msra.mxu0 0
    %102 = vmatprep.subr.bf16.mxu0 0
    %103 = vmatpush1.bf16.msra.mxu0 0
    %104 = vmatprep.subr.bf16.mxu0 0
    %105 = vmatpush1.bf16.msra.mxu0 0
    %106 = vmatprep.subr.bf16.mxu0 0
    %107 = vmatpush1.bf16.msra.mxu0 0
    %108 = vmatprep.subr.bf16.mxu0 0
    %109 = vmatpush1.bf16.msra.mxu0 0
    %110 = vmatprep.subr.bf16.mxu0 0
    %111 = vmatpush1.bf16.msra.mxu0 0
    %112 = vmatprep.subr.bf16.mxu0 0
    %113 = vmatpush1.bf16.msra.mxu0 0
    %114 = vmatprep.subr.bf16.mxu0 0
    %115 = vmatpush1.bf16.msra.mxu0 0
    %116 = vmatprep.subr.bf16.mxu0 0
    %117 = vmatpush1.bf16.msra.mxu0 0
    %118 = vmatprep.subr.bf16.mxu0 0
    %119 = vmatpush1.bf16.msra.mxu0 0
    %120 = vmatprep.subr.bf16.mxu0 0
    %121 = vmatpush1.bf16.msra.mxu0 0
    %122 = vmatprep.subr.bf16.mxu0 0
    %123 = vmatpush1.bf16.msra.mxu0 0
    %124 = vmatprep.subr.bf16.mxu0 0
    %125 = vmatpush1.bf16.msra.mxu0 0
    %126 = vmatprep.subr.bf16.mxu0 0
    %127 = vmatpush1.bf16.msra.mxu0 0
    %128 = vmatprep.mubr.bf16.mxu0 0
    %129 = vmatmul.mubr.bf16.gmra.mrb[0].mxu0 %v85
    %v130 = vpop.f32.mrb[0].mxu0
    %v131 = vadd.f32 0.0, %v130
    %v132 = vpop.f32.mrb[0].mxu0
    %v133 = vpop.f32.mrb[0].mxu0
    %v134 = vadd.f32 0.0, %v133
    %v135 = vpop.f32.mrb[0].mxu0
    %136 = vmatprep.mubr.bf16.mxu0 0
    %137 = vmatmul.mubr.bf16.gmra.mrb[0].mxu0 %v88
    %v138 = vpop.f32.mrb[0].mxu0
    %v139 = vadd.f32 0.0, %v138
    %v140 = vpop.f32.mrb[0].mxu0
    %v141 = vpop.f32.mrb[0].mxu0
    %v142 = vadd.f32 0.0, %v141
    %v143 = vpop.f32.mrb[0].mxu0
    %144 = vmatprep.mubr.bf16.mxu0 0
    %145 = vmatmul.mubr.bf16.gmra.mrb[0].mxu0 %v91
    %v146 = vpop.f32.mrb[0].mxu0
    %v147 = vadd.f32 0.0, %v146
    %v148 = vpop.f32.mrb[0].mxu0
    %v149 = vpop.f32.mrb[0].mxu0
    %v150 = vadd.f32 0.0, %v149
    %v151 = vpop.f32.mrb[0].mxu0
    %152 = vmatprep.mubr.bf16.mxu0 0
    %153 = vmatmul.mubr.bf16.gmra.mrb[0].mxu0 %v94
    %v154 = vpop.f32.mrb[0].mxu0
    %v155 = vadd.f32 0.0, %v154
    %v156 = vpop.f32.mrb[0].mxu0
    %v157 = vpop.f32.mrb[0].mxu0
    %v158 = vadd.f32 0.0, %v157
    %v159 = vpop.f32.mrb[0].mxu0
    %160 = vdwg.mxu0
    %v161 = vld [vmem:[%s2] sm:$0x1]
    %v162 = vlaneseq
    %v163 = vshrl.u32 %v162, 7
    %v164 = vsub.s32 0, %v163
    %v165 = vrot.slane %v161, %v164
    %v166 = vmul.f32 %v131, %v165
    %v167 = vmul.f32 %v134, %v165
    %v168 = vmul.f32 %v139, %v165
    %v169 = vmul.f32 %v142, %v165
    %v170 = vmul.f32 %v147, %v165
    %v171 = vmul.f32 %v150, %v165
    %v172 = vmul.f32 %v155, %v165
    %v173 = vmul.f32 %v158, %v165
    %v174 = vld [vmem:[%s2 + $0x1] sm:$0x1]
    %v175 = vlaneseq
    %v176 = vshrl.u32 %v175, 7
    %v177 = vsub.s32 0, %v176
    %v178 = vrot.slane %v174, %v177
    %v179 = vmul.f32 %v131, %v178
    %v180 = vmul.f32 %v134, %v178
    %v181 = vmul.f32 %v139, %v178
    %v182 = vmul.f32 %v142, %v178
    %v183 = vmul.f32 %v147, %v178
    %v184 = vmul.f32 %v150, %v178
    %v185 = vmul.f32 %v155, %v178
    %v186 = vmul.f32 %v158, %v178
    %vm187 = vcmask 261120
    %v188 = vsel %vm187, %v166, 0.0
    %189 = vadd.xlane.f32.xlu0 %v188
    %v190 = vpop.xlane.xlu0 %189
    %v191 = vsel %vm187, %v167, 0.0
    %192 = vadd.xlane.f32.xlu0 %v191
    %v193 = vpop.xlane.xlu0 %192
    %v194 = vsel %vm187, %v168, 0.0
    %195 = vadd.xlane.f32.xlu0 %v194
    %v196 = vpop.xlane.xlu0 %195
    %v197 = vsel %vm187, %v169, 0.0
    %198 = vadd.xlane.f32.xlu0 %v197
    %v199 = vpop.xlane.xlu0 %198
    %v200 = vsel %vm187, %v170, 0.0
    %201 = vadd.xlane.f32.xlu0 %v200
    %v202 = vpop.xlane.xlu0 %201
    %v203 = vsel %vm187, %v171, 0.0
    %204 = vadd.xlane.f32.xlu0 %v203
    %v205 = vpop.xlane.xlu0 %204
    %v206 = vsel %vm187, %v172, 0.0
    %207 = vadd.xlane.f32.xlu0 %v206
    %v208 = vpop.xlane.xlu0 %207
    %v209 = vsel %vm187, %v173, 0.0
    %210 = vadd.xlane.f32.xlu0 %v209
    %v211 = vpop.xlane.xlu0 %210
    %v212 = vsel %vm187, %v179, 0.0
    %213 = vadd.xlane.f32.xlu0 %v212
    %v214 = vpop.xlane.xlu0 %213
    %v215 = vsel %vm187, %v180, 0.0
    %216 = vadd.xlane.f32.xlu0 %v215
    %v217 = vpop.xlane.xlu0 %216
    %v218 = vsel %vm187, %v181, 0.0
    %219 = vadd.xlane.f32.xlu0 %v218
    %v220 = vpop.xlane.xlu0 %219
    %v221 = vsel %vm187, %v182, 0.0
    %222 = vadd.xlane.f32.xlu0 %v221
    %v223 = vpop.xlane.xlu0 %222
    %v224 = vsel %vm187, %v183, 0.0
    %225 = vadd.xlane.f32.xlu0 %v224
    %v226 = vpop.xlane.xlu0 %225
    %v227 = vsel %vm187, %v184, 0.0
    %228 = vadd.xlane.f32.xlu0 %v227
    %v229 = vpop.xlane.xlu0 %228
    %v230 = vsel %vm187, %v185, 0.0
    %231 = vadd.xlane.f32.xlu0 %v230
    %v232 = vpop.xlane.xlu0 %231
    %v233 = vsel %vm187, %v186, 0.0
    %234 = vadd.xlane.f32.xlu0 %v233
    %v235 = vpop.xlane.xlu0 %234
    %236 = vxpose.xlu0.b32.start [1/16] %v190, 128
    %237 = vxpose.xlu0.b32.cont [2/16] %v193, 128
    %238 = vxpose.xlu0.b32.cont [3/16] %v196, 128
    %239 = vxpose.xlu0.b32.cont [4/16] %v199, 128
    %240 = vxpose.xlu0.b32.cont [5/16] %v202, 128
    %241 = vxpose.xlu0.b32.cont [6/16] %v205, 128
    %242 = vxpose.xlu0.b32.cont [7/16] %v208, 128
    %243 = vxpose.xlu0.b32.cont [8/16] %v211, 128
    %244 = vxpose.xlu0.b32.cont [9/16] 0.0, 128
    %245 = vxpose.xlu0.b32.cont [10/16] 0.0, 128
    %246 = vxpose.xlu0.b32.cont [11/16] 0.0, 128
    %247 = vxpose.xlu0.b32.cont [12/16] 0.0, 128
    %248 = vxpose.xlu0.b32.cont [13/16] 0.0, 128
    %249 = vxpose.xlu0.b32.cont [14/16] 0.0, 128
    %250 = vxpose.xlu0.b32.cont [15/16] 0.0, 128
    %251 = vxpose.xlu0.b32.end [16/16] 0.0, 128
    %v252 = vpop.trf.xlu0
    %v253 = vpop.trf.xlu0
    %v254 = vpop.trf.xlu0
    %v255 = vpop.trf.xlu0
    %v256 = vpop.trf.xlu0
    %v257 = vpop.trf.xlu0
    %v258 = vpop.trf.xlu0
    %v259 = vpop.trf.xlu0
    %v260 = vpop.trf.xlu0
    %v261 = vpop.trf.xlu0
    %v262 = vpop.trf.xlu0
    %v263 = vpop.trf.xlu0
    %v264 = vpop.trf.xlu0
    %v265 = vpop.trf.xlu0
    %v266 = vpop.trf.xlu0
    %v267 = vpop.trf.xlu0
    %v268 = vlaneseq
    %v269 = vshrl.u32 %v268, 7
    %v270 = vsub.s32 0, %v269
    %v271 = vrot.slane %v252, %v270
    %v272 = vadd.f32 %v214, %v271
    %v273 = vadd.f32 %v217, %v271
    %v274 = vadd.f32 %v220, %v271
    %v275 = vadd.f32 %v223, %v271
    %v276 = vadd.f32 %v226, %v271
    %v277 = vadd.f32 %v229, %v271
    %v278 = vadd.f32 %v232, %v271
    %v279 = vadd.f32 %v235, %v271
    %vm280 = vcmp.gt.f32.partialorder %v272, 0.0
    %vm281 = vcmp.gt.f32.partialorder %v273, 0.0
    %vm282 = vcmp.gt.f32.partialorder %v274, 0.0
    %vm283 = vcmp.gt.f32.partialorder %v275, 0.0
    %vm284 = vcmp.gt.f32.partialorder %v276, 0.0
    %vm285 = vcmp.gt.f32.partialorder %v277, 0.0
    %vm286 = vcmp.gt.f32.partialorder %v278, 0.0
    %vm287 = vcmp.gt.f32.partialorder %v279, 0.0
    %v288 = vmul.f32 %v272, 0.2
    %v289 = vmul.f32 %v273, 0.2
    %v290 = vmul.f32 %v274, 0.2
    %v291 = vmul.f32 %v275, 0.2
    %v292 = vmul.f32 %v276, 0.2
    %v293 = vmul.f32 %v277, 0.2
    %v294 = vmul.f32 %v278, 0.2
    %v295 = vmul.f32 %v279, 0.2
    %v296 = vsel %vm280, %v272, %v288
    %v297 = vsel %vm281, %v273, %v289
    %v298 = vsel %vm282, %v274, %v290
    %v299 = vsel %vm283, %v275, %v291
    %v300 = vsel %vm284, %v276, %v292
    %v301 = vsel %vm285, %v277, %v293
    %v302 = vsel %vm286, %v278, %v294
    %v303 = vsel %vm287, %v279, %v295
    %vm304 = vcmask 523264
    %v305 = vsel %vm304, %v296, -inf
    %306 = vmax.xlane.f32.xlu0 %v305
    %v307 = vpop.xlane.xlu0 %306
    %v308 = vsel %vm304, %v297, -inf
    %309 = vmax.xlane.f32.xlu0 %v308
    %v310 = vpop.xlane.xlu0 %309
    %v311 = vsel %vm304, %v298, -inf
    %312 = vmax.xlane.f32.xlu0 %v311
    %v313 = vpop.xlane.xlu0 %312
    %v314 = vsel %vm304, %v299, -inf
    %315 = vmax.xlane.f32.xlu0 %v314
    %v316 = vpop.xlane.xlu0 %315
    %v317 = vsel %vm304, %v300, -inf
    %318 = vmax.xlane.f32.xlu0 %v317
    %v319 = vpop.xlane.xlu0 %318
    %v320 = vsel %vm304, %v301, -inf
    %321 = vmax.xlane.f32.xlu0 %v320
    %v322 = vpop.xlane.xlu0 %321
    %v323 = vsel %vm304, %v302, -inf
    %324 = vmax.xlane.f32.xlu0 %v323
    %v325 = vpop.xlane.xlu0 %324
    %v326 = vsel %vm304, %v303, -inf
    %327 = vmax.xlane.f32.xlu0 %v326
    %v328 = vpop.xlane.xlu0 %327
    %v329 = vsub.f32 %v296, %v307
    %v330 = vsub.f32 %v297, %v310
    %v331 = vsub.f32 %v298, %v313
    %v332 = vsub.f32 %v299, %v316
    %v333 = vsub.f32 %v300, %v319
    %v334 = vsub.f32 %v301, %v322
    %v335 = vsub.f32 %v302, %v325
    %v336 = vsub.f32 %v303, %v328
    %v337 = vmul.f32 %v329, 1.442695
    %v338 = vpow.pop %v337
    %v339 = vmul.f32 %v330, 1.442695
    %v340 = vpow.pop %v339
    %v341 = vmul.f32 %v331, 1.442695
    %v342 = vpow.pop %v341
    %v343 = vmul.f32 %v332, 1.442695
    %v344 = vpow.pop %v343
    %v345 = vmul.f32 %v333, 1.442695
    %v346 = vpow.pop %v345
    %v347 = vmul.f32 %v334, 1.442695
    %v348 = vpow.pop %v347
    %v349 = vmul.f32 %v335, 1.442695
    %v350 = vpow.pop %v349
    %v351 = vmul.f32 %v336, 1.442695
    %v352 = vpow.pop %v351
    %v353 = vmul.f32 %v338, %v39
    %v354 = vmul.f32 %v340, %v40
    %v355 = vmul.f32 %v342, %v41
    %v356 = vmul.f32 %v344, %v42
    %v357 = vmul.f32 %v346, %v43
    %v358 = vmul.f32 %v348, %v44
    %v359 = vmul.f32 %v350, %v45
    %v360 = vmul.f32 %v352, %v46
    %v361 = vsel %vm304, %v353, 0.0
    %362 = vadd.xlane.f32.xlu0 %v361
    %v363 = vpop.xlane.xlu0 %362
    %v364 = vsel %vm304, %v354, 0.0
    %365 = vadd.xlane.f32.xlu0 %v364
    %v366 = vpop.xlane.xlu0 %365
    %v367 = vsel %vm304, %v355, 0.0
    %368 = vadd.xlane.f32.xlu0 %v367
    %v369 = vpop.xlane.xlu0 %368
    %v370 = vsel %vm304, %v356, 0.0
    %371 = vadd.xlane.f32.xlu0 %v370
    %v372 = vpop.xlane.xlu0 %371
    %v373 = vsel %vm304, %v357, 0.0
    %374 = vadd.xlane.f32.xlu0 %v373
    %v375 = vpop.xlane.xlu0 %374
    %v376 = vsel %vm304, %v358, 0.0
    %377 = vadd.xlane.f32.xlu0 %v376
    %v378 = vpop.xlane.xlu0 %377
    %v379 = vsel %vm304, %v359, 0.0
    %380 = vadd.xlane.f32.xlu0 %v379
    %v381 = vpop.xlane.xlu0 %380
    %v382 = vsel %vm304, %v360, 0.0
    %383 = vadd.xlane.f32.xlu0 %v382
    %v384 = vpop.xlane.xlu0 %383
    %v385 = vrcp.pop %v363
    %v386 = vrcp.pop %v366
    %v387 = vrcp.pop %v369
    %v388 = vrcp.pop %v372
    %v389 = vrcp.pop %v375
    %v390 = vrcp.pop %v378
    %v391 = vrcp.pop %v381
    %v392 = vrcp.pop %v384
    %v393 = vmul.f32 %v353, %v385
    %v394 = vmul.f32 %v354, %v386
    %v395 = vmul.f32 %v355, %v387
    %v396 = vmul.f32 %v356, %v388
    %v397 = vmul.f32 %v357, %v389
    %v398 = vmul.f32 %v358, %v390
    %v399 = vmul.f32 %v359, %v391
    %v400 = vmul.f32 %v360, %v392
    %v401 = vpack.c.bf16 %v394, %v393
    %v402 = vpack.c.bf16 %v396, %v395
    %v403 = vpack.c.bf16 %v398, %v397
    %v404 = vpack.c.bf16 %v400, %v399
    %v405 = vpack.c.bf16 %v134, %v131
    %v406 = vpack.c.bf16 %v142, %v139
    %v407 = vpack.c.bf16 %v150, %v147
    %v408 = vpack.c.bf16 %v158, %v155
    %417 = vrot.lane.b32.xlu0 %v166, 96
    %v418 = vpop.permute.xlu0 %417
    %419 = vrot.lane.b32.xlu0 %v167, 96
    %v420 = vpop.permute.xlu0 %419
    %421 = vrot.lane.b32.xlu0 %v168, 96
    %v422 = vpop.permute.xlu0 %421
    %423 = vrot.lane.b32.xlu0 %v169, 96
    %v424 = vpop.permute.xlu0 %423
    %425 = vrot.lane.b32.xlu0 %v170, 96
    %v426 = vpop.permute.xlu0 %425
    %427 = vrot.lane.b32.xlu0 %v171, 96
    %v428 = vpop.permute.xlu0 %427
    %429 = vrot.lane.b32.xlu0 %v172, 96
    %v430 = vpop.permute.xlu0 %429
    %431 = vrot.lane.b32.xlu0 %v173, 96
    %v432 = vpop.permute.xlu0 %431
    %v441 = vsel %vm187, %v418, 0.0
    %442 = vadd.xlane.f32.xlu0 %v441
    %v443 = vpop.xlane.xlu0 %442
    %v444 = vsel %vm187, %v420, 0.0
    %445 = vadd.xlane.f32.xlu0 %v444
    %v446 = vpop.xlane.xlu0 %445
    %v447 = vsel %vm187, %v422, 0.0
    %448 = vadd.xlane.f32.xlu0 %v447
    %v449 = vpop.xlane.xlu0 %448
    %v450 = vsel %vm187, %v424, 0.0
    %451 = vadd.xlane.f32.xlu0 %v450
    %v452 = vpop.xlane.xlu0 %451
    %v453 = vsel %vm187, %v426, 0.0
    %454 = vadd.xlane.f32.xlu0 %v453
    %v455 = vpop.xlane.xlu0 %454
    %v456 = vsel %vm187, %v428, 0.0
    %457 = vadd.xlane.f32.xlu0 %v456
    %v458 = vpop.xlane.xlu0 %457
    %v459 = vsel %vm187, %v430, 0.0
    %460 = vadd.xlane.f32.xlu0 %v459
    %v461 = vpop.xlane.xlu0 %460
    %v462 = vsel %vm187, %v432, 0.0
    %463 = vadd.xlane.f32.xlu0 %v462
    %v464 = vpop.xlane.xlu0 %463
    %473 = vrot.lane.b32.xlu0 %v179, 96
    %v474 = vpop.permute.xlu0 %473
    %475 = vrot.lane.b32.xlu0 %v180, 96
    %v476 = vpop.permute.xlu0 %475
    %477 = vrot.lane.b32.xlu0 %v181, 96
    %v478 = vpop.permute.xlu0 %477
    %479 = vrot.lane.b32.xlu0 %v182, 96
    %v480 = vpop.permute.xlu0 %479
    %481 = vrot.lane.b32.xlu0 %v183, 96
    %v482 = vpop.permute.xlu0 %481
    %483 = vrot.lane.b32.xlu0 %v184, 96
    %v484 = vpop.permute.xlu0 %483
    %485 = vrot.lane.b32.xlu0 %v185, 96
    %v486 = vpop.permute.xlu0 %485
    %487 = vrot.lane.b32.xlu0 %v186, 96
    %v488 = vpop.permute.xlu0 %487
    %v497 = vsel %vm187, %v474, 0.0
    %498 = vadd.xlane.f32.xlu0 %v497
    %v499 = vpop.xlane.xlu0 %498
    %v500 = vsel %vm187, %v476, 0.0
    %501 = vadd.xlane.f32.xlu0 %v500
    %v502 = vpop.xlane.xlu0 %501
    %v503 = vsel %vm187, %v478, 0.0
    %504 = vadd.xlane.f32.xlu0 %v503
    %v505 = vpop.xlane.xlu0 %504
    %v506 = vsel %vm187, %v480, 0.0
    %507 = vadd.xlane.f32.xlu0 %v506
    %v508 = vpop.xlane.xlu0 %507
    %v509 = vsel %vm187, %v482, 0.0
    %510 = vadd.xlane.f32.xlu0 %v509
    %v511 = vpop.xlane.xlu0 %510
    %v512 = vsel %vm187, %v484, 0.0
    %513 = vadd.xlane.f32.xlu0 %v512
    %v514 = vpop.xlane.xlu0 %513
    %v515 = vsel %vm187, %v486, 0.0
    %516 = vadd.xlane.f32.xlu0 %v515
    %v517 = vpop.xlane.xlu0 %516
    %v518 = vsel %vm187, %v488, 0.0
    %519 = vadd.xlane.f32.xlu0 %v518
    %v520 = vpop.xlane.xlu0 %519
    %521 = vxpose.xlu0.b32.start [1/16] %v443, 128
    %522 = vxpose.xlu0.b32.cont [2/16] %v446, 128
    %523 = vxpose.xlu0.b32.cont [3/16] %v449, 128
    %524 = vxpose.xlu0.b32.cont [4/16] %v452, 128
    %525 = vxpose.xlu0.b32.cont [5/16] %v455, 128
    %526 = vxpose.xlu0.b32.cont [6/16] %v458, 128
    %527 = vxpose.xlu0.b32.cont [7/16] %v461, 128
    %528 = vxpose.xlu0.b32.cont [8/16] %v464, 128
    %529 = vxpose.xlu0.b32.cont [9/16] 0.0, 128
    %530 = vxpose.xlu0.b32.cont [10/16] 0.0, 128
    %531 = vxpose.xlu0.b32.cont [11/16] 0.0, 128
    %532 = vxpose.xlu0.b32.cont [12/16] 0.0, 128
    %533 = vxpose.xlu0.b32.cont [13/16] 0.0, 128
    %534 = vxpose.xlu0.b32.cont [14/16] 0.0, 128
    %535 = vxpose.xlu0.b32.cont [15/16] 0.0, 128
    %536 = vxpose.xlu0.b32.end [16/16] 0.0, 128
    %v537 = vpop.trf.xlu0
    %v538 = vpop.trf.xlu0
    %v539 = vpop.trf.xlu0
    %v540 = vpop.trf.xlu0
    %v541 = vpop.trf.xlu0
    %v542 = vpop.trf.xlu0
    %v543 = vpop.trf.xlu0
    %v544 = vpop.trf.xlu0
    %v545 = vpop.trf.xlu0
    %v546 = vpop.trf.xlu0
    %v547 = vpop.trf.xlu0
    %v548 = vpop.trf.xlu0
    %v549 = vpop.trf.xlu0
    %v550 = vpop.trf.xlu0
    %v551 = vpop.trf.xlu0
    %v552 = vpop.trf.xlu0
    %v553 = vlaneseq
    %v554 = vshrl.u32 %v553, 7
    %v555 = vsub.s32 0, %v554
    %v556 = vrot.slane %v537, %v555
    %v557 = vadd.f32 %v499, %v556
    %v558 = vadd.f32 %v502, %v556
    %v559 = vadd.f32 %v505, %v556
    %v560 = vadd.f32 %v508, %v556
    %v561 = vadd.f32 %v511, %v556
    %v562 = vadd.f32 %v514, %v556
    %v563 = vadd.f32 %v517, %v556
    %v564 = vadd.f32 %v520, %v556
    %vm565 = vcmp.gt.f32.partialorder %v557, 0.0
    %vm566 = vcmp.gt.f32.partialorder %v558, 0.0
    %vm567 = vcmp.gt.f32.partialorder %v559, 0.0
    %vm568 = vcmp.gt.f32.partialorder %v560, 0.0
    %vm569 = vcmp.gt.f32.partialorder %v561, 0.0
    %vm570 = vcmp.gt.f32.partialorder %v562, 0.0
    %vm571 = vcmp.gt.f32.partialorder %v563, 0.0
    %vm572 = vcmp.gt.f32.partialorder %v564, 0.0
    %v573 = vmul.f32 %v557, 0.2
    %v574 = vmul.f32 %v558, 0.2
    %v575 = vmul.f32 %v559, 0.2
    %v576 = vmul.f32 %v560, 0.2
    %v577 = vmul.f32 %v561, 0.2
    %v578 = vmul.f32 %v562, 0.2
    %v579 = vmul.f32 %v563, 0.2
    %v580 = vmul.f32 %v564, 0.2
    %v581 = vsel %vm565, %v557, %v573
    %v582 = vsel %vm566, %v558, %v574
    %v583 = vsel %vm567, %v559, %v575
    %v584 = vsel %vm568, %v560, %v576
    %v585 = vsel %vm569, %v561, %v577
    %v586 = vsel %vm570, %v562, %v578
    %v587 = vsel %vm571, %v563, %v579
    %v588 = vsel %vm572, %v564, %v580
    %v589 = vsel %vm304, %v581, -inf
    %590 = vmax.xlane.f32.xlu0 %v589
    %v591 = vpop.xlane.xlu0 %590
    %v592 = vsel %vm304, %v582, -inf
    %593 = vmax.xlane.f32.xlu0 %v592
    %v594 = vpop.xlane.xlu0 %593
    %v595 = vsel %vm304, %v583, -inf
    %596 = vmax.xlane.f32.xlu0 %v595
    %v597 = vpop.xlane.xlu0 %596
    %v598 = vsel %vm304, %v584, -inf
    %599 = vmax.xlane.f32.xlu0 %v598
    %v600 = vpop.xlane.xlu0 %599
    %v601 = vsel %vm304, %v585, -inf
    %602 = vmax.xlane.f32.xlu0 %v601
    %v603 = vpop.xlane.xlu0 %602
    %v604 = vsel %vm304, %v586, -inf
    %605 = vmax.xlane.f32.xlu0 %v604
    %v606 = vpop.xlane.xlu0 %605
    %v607 = vsel %vm304, %v587, -inf
    %608 = vmax.xlane.f32.xlu0 %v607
    %v609 = vpop.xlane.xlu0 %608
    %v610 = vsel %vm304, %v588, -inf
    %611 = vmax.xlane.f32.xlu0 %v610
    %v612 = vpop.xlane.xlu0 %611
    %v613 = vsub.f32 %v581, %v591
    %v614 = vsub.f32 %v582, %v594
    %v615 = vsub.f32 %v583, %v597
    %v616 = vsub.f32 %v584, %v600
    %v617 = vsub.f32 %v585, %v603
    %v618 = vsub.f32 %v586, %v606
    %v619 = vsub.f32 %v587, %v609
    %v620 = vsub.f32 %v588, %v612
    %v621 = vmul.f32 %v613, 1.442695
    %v622 = vpow.pop %v621
    %v623 = vmul.f32 %v614, 1.442695
    %v624 = vpow.pop %v623
    %v625 = vmul.f32 %v615, 1.442695
    %v626 = vpow.pop %v625
    %v627 = vmul.f32 %v616, 1.442695
    %v628 = vpow.pop %v627
    %v629 = vmul.f32 %v617, 1.442695
    %v630 = vpow.pop %v629
    %v631 = vmul.f32 %v618, 1.442695
    %v632 = vpow.pop %v631
    %v633 = vmul.f32 %v619, 1.442695
    %v634 = vpow.pop %v633
    %v635 = vmul.f32 %v620, 1.442695
    %v636 = vpow.pop %v635
    %v637 = vmul.f32 %v622, %v39
    %v638 = vmul.f32 %v624, %v40
    %v639 = vmul.f32 %v626, %v41
    %v640 = vmul.f32 %v628, %v42
    %v641 = vmul.f32 %v630, %v43
    %v642 = vmul.f32 %v632, %v44
    %v643 = vmul.f32 %v634, %v45
    %v644 = vmul.f32 %v636, %v46
    %v645 = vsel %vm304, %v637, 0.0
    %646 = vadd.xlane.f32.xlu0 %v645
    %v647 = vpop.xlane.xlu0 %646
    %v648 = vsel %vm304, %v638, 0.0
    %649 = vadd.xlane.f32.xlu0 %v648
    %v650 = vpop.xlane.xlu0 %649
    %v651 = vsel %vm304, %v639, 0.0
    %652 = vadd.xlane.f32.xlu0 %v651
    %v653 = vpop.xlane.xlu0 %652
    %v654 = vsel %vm304, %v640, 0.0
    %655 = vadd.xlane.f32.xlu0 %v654
    %v656 = vpop.xlane.xlu0 %655
    %v657 = vsel %vm304, %v641, 0.0
    %658 = vadd.xlane.f32.xlu0 %v657
    %v659 = vpop.xlane.xlu0 %658
    %v660 = vsel %vm304, %v642, 0.0
    %661 = vadd.xlane.f32.xlu0 %v660
    %v662 = vpop.xlane.xlu0 %661
    %v663 = vsel %vm304, %v643, 0.0
    %664 = vadd.xlane.f32.xlu0 %v663
    %v665 = vpop.xlane.xlu0 %664
    %v666 = vsel %vm304, %v644, 0.0
    %667 = vadd.xlane.f32.xlu0 %v666
    %v668 = vpop.xlane.xlu0 %667
    %v669 = vrcp.pop %v647
    %v670 = vrcp.pop %v650
    %v671 = vrcp.pop %v653
    %v672 = vrcp.pop %v656
    %v673 = vrcp.pop %v659
    %v674 = vrcp.pop %v662
    %v675 = vrcp.pop %v665
    %v676 = vrcp.pop %v668
    %v677 = vmul.f32 %v637, %v669
    %v678 = vmul.f32 %v638, %v670
    %v679 = vmul.f32 %v639, %v671
    %v680 = vmul.f32 %v640, %v672
    %v681 = vmul.f32 %v641, %v673
    %v682 = vmul.f32 %v642, %v674
    %v683 = vmul.f32 %v643, %v675
    %v684 = vmul.f32 %v644, %v676
    %v685 = vpack.c.bf16 %v678, %v677
    %v686 = vpack.c.bf16 %v680, %v679
    %v687 = vpack.c.bf16 %v682, %v681
    %v688 = vpack.c.bf16 %v684, %v683
    %693 = vrot.lane.b32.xlu0 %v405, 96
    %v694 = vpop.permute.xlu0 %693
    %695 = vrot.lane.b32.xlu0 %v406, 96
    %v696 = vpop.permute.xlu0 %695
    %697 = vrot.lane.b32.xlu0 %v407, 96
    %v698 = vpop.permute.xlu0 %697
    %699 = vrot.lane.b32.xlu0 %v408, 96
    %v700 = vpop.permute.xlu0 %699
    %v706 = vsel %vm304, %v685, 0
    %v709 = vsel %vm304, %v686, 0
    %v712 = vsel %vm304, %v687, 0
    %v715 = vsel %vm304, %v688, 0
    %717 = vmatprep.subr.bf16.mxu0 0
    %718 = vmatpush1.bf16.msra.mxu0 %v694
    %719 = vmatprep.subr.bf16.mxu0 0
    %720 = vmatpush1.bf16.msra.mxu0 %v696
    %721 = vmatprep.subr.bf16.mxu0 0
    %722 = vmatpush1.bf16.msra.mxu0 %v698
    %723 = vmatprep.subr.bf16.mxu0 0
    %724 = vmatpush1.bf16.msra.mxu0 %v700
    %725 = vmatprep.subr.bf16.mxu0 0
    %726 = vmatpush1.bf16.msra.mxu0 0
    %727 = vmatprep.subr.bf16.mxu0 0
    %728 = vmatpush1.bf16.msra.mxu0 0
    %729 = vmatprep.subr.bf16.mxu0 0
    %730 = vmatpush1.bf16.msra.mxu0 0
    %731 = vmatprep.subr.bf16.mxu0 0
    %732 = vmatpush1.bf16.msra.mxu0 0
    %733 = vmatprep.subr.bf16.mxu0 0
    %734 = vmatpush1.bf16.msra.mxu0 0
    %735 = vmatprep.subr.bf16.mxu0 0
    %736 = vmatpush1.bf16.msra.mxu0 0
    %737 = vmatprep.subr.bf16.mxu0 0
    %738 = vmatpush1.bf16.msra.mxu0 0
    %739 = vmatprep.subr.bf16.mxu0 0
    %740 = vmatpush1.bf16.msra.mxu0 0
    %741 = vmatprep.subr.bf16.mxu0 0
    %742 = vmatpush1.bf16.msra.mxu0 0
    %743 = vmatprep.subr.bf16.mxu0 0
    %744 = vmatpush1.bf16.msra.mxu0 0
    %745 = vmatprep.subr.bf16.mxu0 0
    %746 = vmatpush1.bf16.msra.mxu0 0
    %747 = vmatprep.subr.bf16.mxu0 0
    %748 = vmatpush1.bf16.msra.mxu0 0
    %749 = vmatprep.mubr.bf16.mxu0 0
    %750 = vmatmul.mubr.bf16.gmra.mrb[0].mxu0 %v706
    %v751 = vpop.f32.mrb[0].mxu0
    %v752 = vadd.f32 0.0, %v751
    %v753 = vpop.f32.mrb[0].mxu0
    %v754 = vpop.f32.mrb[0].mxu0
    %v755 = vadd.f32 0.0, %v754
    %v756 = vpop.f32.mrb[0].mxu0
    %757 = vmatprep.mubr.bf16.mxu0 0
    %758 = vmatmul.mubr.bf16.gmra.mrb[0].mxu0 %v709
    %v759 = vpop.f32.mrb[0].mxu0
    %v760 = vadd.f32 0.0, %v759
    %v761 = vpop.f32.mrb[0].mxu0
    %v762 = vpop.f32.mrb[0].mxu0
    %v763 = vadd.f32 0.0, %v762
    %v764 = vpop.f32.mrb[0].mxu0
    %765 = vmatprep.mubr.bf16.mxu0 0
    %766 = vmatmul.mubr.bf16.gmra.mrb[0].mxu0 %v712
    %v767 = vpop.f32.mrb[0].mxu0
    %v768 = vadd.f32 0.0, %v767
    %v769 = vpop.f32.mrb[0].mxu0
    %v770 = vpop.f32.mrb[0].mxu0
    %v771 = vadd.f32 0.0, %v770
    %v772 = vpop.f32.mrb[0].mxu0
    %773 = vmatprep.mubr.bf16.mxu0 0
    %774 = vmatmul.mubr.bf16.gmra.mrb[0].mxu0 %v715
    %v775 = vpop.f32.mrb[0].mxu0
    %v776 = vadd.f32 0.0, %v775
    %v777 = vpop.f32.mrb[0].mxu0
    %v778 = vpop.f32.mrb[0].mxu0
    %v779 = vadd.f32 0.0, %v778
    %v780 = vpop.f32.mrb[0].mxu0
    %781 = vdwg.mxu0
    %v783 = vsel %vm304, %v401, 0
    %v786 = vsel %vm304, %v402, 0
    %v789 = vsel %vm304, %v403, 0
    %v792 = vsel %vm304, %v404, 0
    %794 = vmatprep.subr.bf16.mxu0 0
    %795 = vmatpush1.bf16.msra.mxu0 %v405
    %796 = vmatprep.subr.bf16.mxu0 0
    %797 = vmatpush1.bf16.msra.mxu0 %v406
    %798 = vmatprep.subr.bf16.mxu0 0
    %799 = vmatpush1.bf16.msra.mxu0 %v407
    %800 = vmatprep.subr.bf16.mxu0 0
    %801 = vmatpush1.bf16.msra.mxu0 %v408
    %802 = vmatprep.subr.bf16.mxu0 0
    %803 = vmatpush1.bf16.msra.mxu0 0
    %804 = vmatprep.subr.bf16.mxu0 0
    %805 = vmatpush1.bf16.msra.mxu0 0
    %806 = vmatprep.subr.bf16.mxu0 0
    %807 = vmatpush1.bf16.msra.mxu0 0
    %808 = vmatprep.subr.bf16.mxu0 0
    %809 = vmatpush1.bf16.msra.mxu0 0
    %810 = vmatprep.subr.bf16.mxu0 0
    %811 = vmatpush1.bf16.msra.mxu0 0
    %812 = vmatprep.subr.bf16.mxu0 0
    %813 = vmatpush1.bf16.msra.mxu0 0
    %814 = vmatprep.subr.bf16.mxu0 0
    %815 = vmatpush1.bf16.msra.mxu0 0
    %816 = vmatprep.subr.bf16.mxu0 0
    %817 = vmatpush1.bf16.msra.mxu0 0
    %818 = vmatprep.subr.bf16.mxu0 0
    %819 = vmatpush1.bf16.msra.mxu0 0
    %820 = vmatprep.subr.bf16.mxu0 0
    %821 = vmatpush1.bf16.msra.mxu0 0
    %822 = vmatprep.subr.bf16.mxu0 0
    %823 = vmatpush1.bf16.msra.mxu0 0
    %824 = vmatprep.subr.bf16.mxu0 0
    %825 = vmatpush1.bf16.msra.mxu0 0
    %826 = vmatprep.mubr.bf16.mxu0 0
    %827 = vmatmul.mubr.bf16.gmra.mrb[0].mxu0 %v783
    %v828 = vpop.f32.mrb[0].mxu0
    %v829 = vadd.f32 %v752, %v828
    %v830 = vpop.f32.mrb[0].mxu0
    %v831 = vpop.f32.mrb[0].mxu0
    %v832 = vadd.f32 %v755, %v831
    %v833 = vpop.f32.mrb[0].mxu0
    %834 = vmatprep.mubr.bf16.mxu0 0
    %835 = vmatmul.mubr.bf16.gmra.mrb[0].mxu0 %v786
    %v836 = vpop.f32.mrb[0].mxu0
    %v837 = vadd.f32 %v760, %v836
    %v838 = vpop.f32.mrb[0].mxu0
    %v839 = vpop.f32.mrb[0].mxu0
    %v840 = vadd.f32 %v763, %v839
    %v841 = vpop.f32.mrb[0].mxu0
    %842 = vmatprep.mubr.bf16.mxu0 0
    %843 = vmatmul.mubr.bf16.gmra.mrb[0].mxu0 %v789
    %v844 = vpop.f32.mrb[0].mxu0
    %v845 = vadd.f32 %v768, %v844
    %v846 = vpop.f32.mrb[0].mxu0
    %v847 = vpop.f32.mrb[0].mxu0
    %v848 = vadd.f32 %v771, %v847
    %v849 = vpop.f32.mrb[0].mxu0
    %850 = vmatprep.mubr.bf16.mxu0 0
    %851 = vmatmul.mubr.bf16.gmra.mrb[0].mxu0 %v792
    %v852 = vpop.f32.mrb[0].mxu0
    %v853 = vadd.f32 %v776, %v852
    %v854 = vpop.f32.mrb[0].mxu0
    %v855 = vpop.f32.mrb[0].mxu0
    %v856 = vadd.f32 %v779, %v855
    %v857 = vpop.f32.mrb[0].mxu0
    %858 = vdwg.mxu0
    %v859 = vld [vmem:[%s2 + $0x2] sm:$0x1]
    %v860 = vlaneseq
    %v861 = vshrl.u32 %v860, 7
    %v862 = vsub.s32 0, %v861
    %v863 = vrot.slane %v859, %v862
    %v864 = vmul.f32 %v829, %v863
    %v865 = vmul.f32 %v832, %v863
    %v866 = vmul.f32 %v837, %v863
    %v867 = vmul.f32 %v840, %v863
    %v868 = vmul.f32 %v845, %v863
    %v869 = vmul.f32 %v848, %v863
    %v870 = vmul.f32 %v853, %v863
    %v871 = vmul.f32 %v856, %v863
    %v872 = vld [vmem:[%s2 + $0x3] sm:$0x1]
    %v873 = vlaneseq
    %v874 = vshrl.u32 %v873, 7
    %v875 = vsub.s32 0, %v874
    %v876 = vrot.slane %v872, %v875
    %v877 = vadd.f32 %v864, %v876
    %v878 = vadd.f32 %v865, %v876
    %v879 = vadd.f32 %v866, %v876
    %v880 = vadd.f32 %v867, %v876
    %v881 = vadd.f32 %v868, %v876
    %v882 = vadd.f32 %v869, %v876
    %v883 = vadd.f32 %v870, %v876
    %v884 = vadd.f32 %v871, %v876
    %v885 = vld [vmem:[%s4] sm:$0xf]
    %v886 = vld [vmem:[%s4 + $0x4] sm:$0xf]
    %v889 = vunpack.c.l.b16 %v885
    %v890 = vunpack.c.l.b16 %v886
    %v891 = vpack.c.b16 %v890, %v889
    %893 = vmatprep.subr.bf16.mxu0 0
    %894 = vmatpush1.bf16.msra.mxu0 %v891
    %895 = vmatprep.subr.bf16.mxu0 0
    %896 = vmatpush1.bf16.msra.mxu0 0
    %897 = vmatprep.subr.bf16.mxu0 0
    %898 = vmatpush1.bf16.msra.mxu0 0
    %899 = vmatprep.subr.bf16.mxu0 0
    %900 = vmatpush1.bf16.msra.mxu0 0
    %901 = vmatprep.subr.bf16.mxu0 0
    %902 = vmatpush1.bf16.msra.mxu0 0
    %903 = vmatprep.subr.bf16.mxu0 0
    %904 = vmatpush1.bf16.msra.mxu0 0
    %905 = vmatprep.subr.bf16.mxu0 0
    %906 = vmatpush1.bf16.msra.mxu0 0
    %907 = vmatprep.subr.bf16.mxu0 0
    %908 = vmatpush1.bf16.msra.mxu0 0
    %909 = vmatprep.subr.bf16.mxu0 0
    %910 = vmatpush1.bf16.msra.mxu0 0
    %911 = vmatprep.subr.bf16.mxu0 0
    %912 = vmatpush1.bf16.msra.mxu0 0
    %913 = vmatprep.subr.bf16.mxu0 0
    %914 = vmatpush1.bf16.msra.mxu0 0
    %915 = vmatprep.subr.bf16.mxu0 0
    %916 = vmatpush1.bf16.msra.mxu0 0
    %917 = vmatprep.subr.bf16.mxu0 0
    %918 = vmatpush1.bf16.msra.mxu0 0
    %919 = vmatprep.subr.bf16.mxu0 0
    %920 = vmatpush1.bf16.msra.mxu0 0
    %921 = vmatprep.subr.bf16.mxu0 0
    %922 = vmatpush1.bf16.msra.mxu0 0
    %923 = vmatprep.subr.bf16.mxu0 0
    %924 = vmatpush1.bf16.msra.mxu0 0
    %925 = vmatprep.mubr.bf16.mxu0 0
    %926 = vmatmul.mubr.bf16.gmra.mrb[0].mxu0 %v85
    %v927 = vpop.f32.mrb[0].mxu0
    %v928 = vadd.f32 0.0, %v927
    %v929 = vpop.f32.mrb[0].mxu0
    %v930 = vpop.f32.mrb[0].mxu0
    %v931 = vadd.f32 0.0, %v930
    %v932 = vpop.f32.mrb[0].mxu0
    %933 = vmatprep.mubr.bf16.mxu0 0
    %934 = vmatmul.mubr.bf16.gmra.mrb[0].mxu0 %v88
    %v935 = vpop.f32.mrb[0].mxu0
    %v936 = vadd.f32 0.0, %v935
    %v937 = vpop.f32.mrb[0].mxu0
    %v938 = vpop.f32.mrb[0].mxu0
    %v939 = vadd.f32 0.0, %v938
    %v940 = vpop.f32.mrb[0].mxu0
    %941 = vmatprep.mubr.bf16.mxu0 0
    %942 = vmatmul.mubr.bf16.gmra.mrb[0].mxu0 %v91
    %v943 = vpop.f32.mrb[0].mxu0
    %v944 = vadd.f32 0.0, %v943
    %v945 = vpop.f32.mrb[0].mxu0
    %v946 = vpop.f32.mrb[0].mxu0
    %v947 = vadd.f32 0.0, %v946
    %v948 = vpop.f32.mrb[0].mxu0
    %949 = vmatprep.mubr.bf16.mxu0 0
    %950 = vmatmul.mubr.bf16.gmra.mrb[0].mxu0 %v94
    %v951 = vpop.f32.mrb[0].mxu0
    %v952 = vadd.f32 0.0, %v951
    %v953 = vpop.f32.mrb[0].mxu0
    %v954 = vpop.f32.mrb[0].mxu0
    %v955 = vadd.f32 0.0, %v954
    %v956 = vpop.f32.mrb[0].mxu0
    %957 = vdwg.mxu0
    %v958 = vadd.f32 %v877, %v928
    %v959 = vadd.f32 %v878, %v931
    %v960 = vadd.f32 %v879, %v936
    %v961 = vadd.f32 %v880, %v939
    %v962 = vadd.f32 %v881, %v944
    %v963 = vadd.f32 %v882, %v947
    %v964 = vadd.f32 %v883, %v952
    %v965 = vadd.f32 %v884, %v955
    %vm966 = vcmp.gt.f32.partialorder %v958, 0.0
    %vm967 = vcmp.gt.f32.partialorder %v959, 0.0
    %vm968 = vcmp.gt.f32.partialorder %v960, 0.0
    %vm969 = vcmp.gt.f32.partialorder %v961, 0.0
    %vm970 = vcmp.gt.f32.partialorder %v962, 0.0
    %vm971 = vcmp.gt.f32.partialorder %v963, 0.0
    %vm972 = vcmp.gt.f32.partialorder %v964, 0.0
    %vm973 = vcmp.gt.f32.partialorder %v965, 0.0
    %v974 = vmul.f32 %v958, 1.442695
    %v975 = vpow.pop %v974
    %v976 = vmul.f32 %v959, 1.442695
    %v977 = vpow.pop %v976
    %v978 = vmul.f32 %v960, 1.442695
    %v979 = vpow.pop %v978
    %v980 = vmul.f32 %v961, 1.442695
    %v981 = vpow.pop %v980
    %v982 = vmul.f32 %v962, 1.442695
    %v983 = vpow.pop %v982
    %v984 = vmul.f32 %v963, 1.442695
    %v985 = vpow.pop %v984
    %v986 = vmul.f32 %v964, 1.442695
    %v987 = vpow.pop %v986
    %v988 = vmul.f32 %v965, 1.442695
    %v989 = vpow.pop %v988
    %v990 = vsub.f32 %v975, 1.0
    %v991 = vsub.f32 %v977, 1.0
    %v992 = vsub.f32 %v979, 1.0
    %v993 = vsub.f32 %v981, 1.0
    %v994 = vsub.f32 %v983, 1.0
    %v995 = vsub.f32 %v985, 1.0
    %v996 = vsub.f32 %v987, 1.0
    %v997 = vsub.f32 %v989, 1.0
    %v998 = vsel %vm966, %v958, %v990
    %v999 = vsel %vm967, %v959, %v991
    %v1000 = vsel %vm968, %v960, %v992
    %v1001 = vsel %vm969, %v961, %v993
    %v1002 = vsel %vm970, %v962, %v994
    %v1003 = vsel %vm971, %v963, %v995
    %v1004 = vsel %vm972, %v964, %v996
    %v1005 = vsel %vm973, %v965, %v997
    %v1006 = vld [vmem:[%s5] sm:$0xf]
    %v1007 = vld [vmem:[%s5 + $0x4] sm:$0xf]
    %v1008 = vld [vmem:[%s5 + $0x8] sm:$0xf]
    %v1009 = vld [vmem:[%s5 + $0xc] sm:$0xf]
    %v1010 = vpack.c.bf16 %v999, %v998
    %v1011 = vpack.c.bf16 %v1001, %v1000
    %v1012 = vpack.c.bf16 %v1003, %v1002
    %v1013 = vpack.c.bf16 %v1005, %v1004
    %v1018 = vunpack.c.l.b16 %v1006
    %v1019 = vunpack.c.l.b16 %v1007
    %v1020 = vunpack.c.l.b16 %v1008
    %v1021 = vunpack.c.l.b16 %v1009
    %v1022 = vpack.c.b16 %v1019, %v1018
    %v1023 = vpack.c.b16 %v1021, %v1020
    %v1027 = vsel %vm187, %v1010, 0
    %v1030 = vsel %vm187, %v1011, 0
    %v1033 = vsel %vm187, %v1012, 0
    %v1036 = vsel %vm187, %v1013, 0
    %1038 = vmatprep.subr.bf16.mxu0 0
    %1039 = vmatpush1.bf16.msra.mxu0 %v1022
    %1040 = vmatprep.subr.bf16.mxu0 0
    %1041 = vmatpush1.bf16.msra.mxu0 %v1023
    %1042 = vmatprep.subr.bf16.mxu0 0
    %1043 = vmatpush1.bf16.msra.mxu0 0
    %1044 = vmatprep.subr.bf16.mxu0 0
    %1045 = vmatpush1.bf16.msra.mxu0 0
    %1046 = vmatprep.subr.bf16.mxu0 0
    %1047 = vmatpush1.bf16.msra.mxu0 0
    %1048 = vmatprep.subr.bf16.mxu0 0
    %1049 = vmatpush1.bf16.msra.mxu0 0
    %1050 = vmatprep.subr.bf16.mxu0 0
    %1051 = vmatpush1.bf16.msra.mxu0 0
    %1052 = vmatprep.subr.bf16.mxu0 0
    %1053 = vmatpush1.bf16.msra.mxu0 0
    %1054 = vmatprep.subr.bf16.mxu0 0
    %1055 = vmatpush1.bf16.msra.mxu0 0
    %1056 = vmatprep.subr.bf16.mxu0 0
    %1057 = vmatpush1.bf16.msra.mxu0 0
    %1058 = vmatprep.subr.bf16.mxu0 0
    %1059 = vmatpush1.bf16.msra.mxu0 0
    %1060 = vmatprep.subr.bf16.mxu0 0
    %1061 = vmatpush1.bf16.msra.mxu0 0
    %1062 = vmatprep.subr.bf16.mxu0 0
    %1063 = vmatpush1.bf16.msra.mxu0 0
    %1064 = vmatprep.subr.bf16.mxu0 0
    %1065 = vmatpush1.bf16.msra.mxu0 0
    %1066 = vmatprep.subr.bf16.mxu0 0
    %1067 = vmatpush1.bf16.msra.mxu0 0
    %1068 = vmatprep.subr.bf16.mxu0 0
    %1069 = vmatpush1.bf16.msra.mxu0 0
    %1070 = vmatprep.mubr.bf16.mxu0 0
    %1071 = vmatmul.mubr.bf16.gmra.mrb[0].mxu0 %v1027
    %v1072 = vpop.f32.mrb[0].mxu0
    %v1073 = vadd.f32 0.0, %v1072
    %v1074 = vpop.f32.mrb[0].mxu0
    %v1075 = vpop.f32.mrb[0].mxu0
    %v1076 = vadd.f32 0.0, %v1075
    %v1077 = vpop.f32.mrb[0].mxu0
    %1078 = vmatprep.mubr.bf16.mxu0 0
    %1079 = vmatmul.mubr.bf16.gmra.mrb[0].mxu0 %v1030
    %v1080 = vpop.f32.mrb[0].mxu0
    %v1081 = vadd.f32 0.0, %v1080
    %v1082 = vpop.f32.mrb[0].mxu0
    %v1083 = vpop.f32.mrb[0].mxu0
    %v1084 = vadd.f32 0.0, %v1083
    %v1085 = vpop.f32.mrb[0].mxu0
    %1086 = vmatprep.mubr.bf16.mxu0 0
    %1087 = vmatmul.mubr.bf16.gmra.mrb[0].mxu0 %v1033
    %v1088 = vpop.f32.mrb[0].mxu0
    %v1089 = vadd.f32 0.0, %v1088
    %v1090 = vpop.f32.mrb[0].mxu0
    %v1091 = vpop.f32.mrb[0].mxu0
    %v1092 = vadd.f32 0.0, %v1091
    %v1093 = vpop.f32.mrb[0].mxu0
    %1094 = vmatprep.mubr.bf16.mxu0 0
    %1095 = vmatmul.mubr.bf16.gmra.mrb[0].mxu0 %v1036
    %v1096 = vpop.f32.mrb[0].mxu0
    %v1097 = vadd.f32 0.0, %v1096
    %v1098 = vpop.f32.mrb[0].mxu0
    %v1099 = vpop.f32.mrb[0].mxu0
    %v1100 = vadd.f32 0.0, %v1099
    %v1101 = vpop.f32.mrb[0].mxu0
    %1102 = vdwg.mxu0
    %v1103 = vld [vmem:[%s2 + $0x4] sm:$0x1]
    %v1104 = vlaneseq
    %v1105 = vshrl.u32 %v1104, 7
    %v1106 = vsub.s32 0, %v1105
    %v1107 = vrot.slane %v1103, %v1106
    %v1108 = vmul.f32 %v1073, %v1107
    %v1109 = vmul.f32 %v1076, %v1107
    %v1110 = vmul.f32 %v1081, %v1107
    %v1111 = vmul.f32 %v1084, %v1107
    %v1112 = vmul.f32 %v1089, %v1107
    %v1113 = vmul.f32 %v1092, %v1107
    %v1114 = vmul.f32 %v1097, %v1107
    %v1115 = vmul.f32 %v1100, %v1107
    %v1116 = vld [vmem:[%s2 + $0x5] sm:$0x1]
    %v1117 = vlaneseq
    %v1118 = vshrl.u32 %v1117, 7
    %v1119 = vsub.s32 0, %v1118
    %v1120 = vrot.slane %v1116, %v1119
    %v1121 = vmul.f32 %v1073, %v1120
    %v1122 = vmul.f32 %v1076, %v1120
    %v1123 = vmul.f32 %v1081, %v1120
    %v1124 = vmul.f32 %v1084, %v1120
    %v1125 = vmul.f32 %v1089, %v1120
    %v1126 = vmul.f32 %v1092, %v1120
    %v1127 = vmul.f32 %v1097, %v1120
    %v1128 = vmul.f32 %v1100, %v1120
    %v1129 = vsel %vm187, %v1108, 0.0
    %1130 = vadd.xlane.f32.xlu0 %v1129
    %v1131 = vpop.xlane.xlu0 %1130
    %v1132 = vsel %vm187, %v1109, 0.0
    %1133 = vadd.xlane.f32.xlu0 %v1132
    %v1134 = vpop.xlane.xlu0 %1133
    %v1135 = vsel %vm187, %v1110, 0.0
    %1136 = vadd.xlane.f32.xlu0 %v1135
    %v1137 = vpop.xlane.xlu0 %1136
    %v1138 = vsel %vm187, %v1111, 0.0
    %1139 = vadd.xlane.f32.xlu0 %v1138
    %v1140 = vpop.xlane.xlu0 %1139
    %v1141 = vsel %vm187, %v1112, 0.0
    %1142 = vadd.xlane.f32.xlu0 %v1141
    %v1143 = vpop.xlane.xlu0 %1142
    %v1144 = vsel %vm187, %v1113, 0.0
    %1145 = vadd.xlane.f32.xlu0 %v1144
    %v1146 = vpop.xlane.xlu0 %1145
    %v1147 = vsel %vm187, %v1114, 0.0
    %1148 = vadd.xlane.f32.xlu0 %v1147
    %v1149 = vpop.xlane.xlu0 %1148
    %v1150 = vsel %vm187, %v1115, 0.0
    %1151 = vadd.xlane.f32.xlu0 %v1150
    %v1152 = vpop.xlane.xlu0 %1151
    %v1153 = vsel %vm187, %v1121, 0.0
    %1154 = vadd.xlane.f32.xlu0 %v1153
    %v1155 = vpop.xlane.xlu0 %1154
    %v1156 = vsel %vm187, %v1122, 0.0
    %1157 = vadd.xlane.f32.xlu0 %v1156
    %v1158 = vpop.xlane.xlu0 %1157
    %v1159 = vsel %vm187, %v1123, 0.0
    %1160 = vadd.xlane.f32.xlu0 %v1159
    %v1161 = vpop.xlane.xlu0 %1160
    %v1162 = vsel %vm187, %v1124, 0.0
    %1163 = vadd.xlane.f32.xlu0 %v1162
    %v1164 = vpop.xlane.xlu0 %1163
    %v1165 = vsel %vm187, %v1125, 0.0
    %1166 = vadd.xlane.f32.xlu0 %v1165
    %v1167 = vpop.xlane.xlu0 %1166
    %v1168 = vsel %vm187, %v1126, 0.0
    %1169 = vadd.xlane.f32.xlu0 %v1168
    %v1170 = vpop.xlane.xlu0 %1169
    %v1171 = vsel %vm187, %v1127, 0.0
    %1172 = vadd.xlane.f32.xlu0 %v1171
    %v1173 = vpop.xlane.xlu0 %1172
    %v1174 = vsel %vm187, %v1128, 0.0
    %1175 = vadd.xlane.f32.xlu0 %v1174
    %v1176 = vpop.xlane.xlu0 %1175
    %1177 = vxpose.xlu0.b32.start [1/16] %v1131, 128
    %1178 = vxpose.xlu0.b32.cont [2/16] %v1134, 128
    %1179 = vxpose.xlu0.b32.cont [3/16] %v1137, 128
    %1180 = vxpose.xlu0.b32.cont [4/16] %v1140, 128
    %1181 = vxpose.xlu0.b32.cont [5/16] %v1143, 128
    %1182 = vxpose.xlu0.b32.cont [6/16] %v1146, 128
    %1183 = vxpose.xlu0.b32.cont [7/16] %v1149, 128
    %1184 = vxpose.xlu0.b32.cont [8/16] %v1152, 128
    %1185 = vxpose.xlu0.b32.cont [9/16] 0.0, 128
    %1186 = vxpose.xlu0.b32.cont [10/16] 0.0, 128
    %1187 = vxpose.xlu0.b32.cont [11/16] 0.0, 128
    %1188 = vxpose.xlu0.b32.cont [12/16] 0.0, 128
    %1189 = vxpose.xlu0.b32.cont [13/16] 0.0, 128
    %1190 = vxpose.xlu0.b32.cont [14/16] 0.0, 128
    %1191 = vxpose.xlu0.b32.cont [15/16] 0.0, 128
    %1192 = vxpose.xlu0.b32.end [16/16] 0.0, 128
    %v1193 = vpop.trf.xlu0
    %v1194 = vpop.trf.xlu0
    %v1195 = vpop.trf.xlu0
    %v1196 = vpop.trf.xlu0
    %v1197 = vpop.trf.xlu0
    %v1198 = vpop.trf.xlu0
    %v1199 = vpop.trf.xlu0
    %v1200 = vpop.trf.xlu0
    %v1201 = vpop.trf.xlu0
    %v1202 = vpop.trf.xlu0
    %v1203 = vpop.trf.xlu0
    %v1204 = vpop.trf.xlu0
    %v1205 = vpop.trf.xlu0
    %v1206 = vpop.trf.xlu0
    %v1207 = vpop.trf.xlu0
    %v1208 = vpop.trf.xlu0
    %v1209 = vlaneseq
    %v1210 = vshrl.u32 %v1209, 7
    %v1211 = vsub.s32 0, %v1210
    %v1212 = vrot.slane %v1193, %v1211
    %v1213 = vadd.f32 %v1155, %v1212
    %v1214 = vadd.f32 %v1158, %v1212
    %v1215 = vadd.f32 %v1161, %v1212
    %v1216 = vadd.f32 %v1164, %v1212
    %v1217 = vadd.f32 %v1167, %v1212
    %v1218 = vadd.f32 %v1170, %v1212
    %v1219 = vadd.f32 %v1173, %v1212
    %v1220 = vadd.f32 %v1176, %v1212
    %vm1221 = vcmp.gt.f32.partialorder %v1213, 0.0
    %vm1222 = vcmp.gt.f32.partialorder %v1214, 0.0
    %vm1223 = vcmp.gt.f32.partialorder %v1215, 0.0
    %vm1224 = vcmp.gt.f32.partialorder %v1216, 0.0
    %vm1225 = vcmp.gt.f32.partialorder %v1217, 0.0
    %vm1226 = vcmp.gt.f32.partialorder %v1218, 0.0
    %vm1227 = vcmp.gt.f32.partialorder %v1219, 0.0
    %vm1228 = vcmp.gt.f32.partialorder %v1220, 0.0
    %v1229 = vmul.f32 %v1213, 0.2
    %v1230 = vmul.f32 %v1214, 0.2
    %v1231 = vmul.f32 %v1215, 0.2
    %v1232 = vmul.f32 %v1216, 0.2
    %v1233 = vmul.f32 %v1217, 0.2
    %v1234 = vmul.f32 %v1218, 0.2
    %v1235 = vmul.f32 %v1219, 0.2
    %v1236 = vmul.f32 %v1220, 0.2
    %v1237 = vsel %vm1221, %v1213, %v1229
    %v1238 = vsel %vm1222, %v1214, %v1230
    %v1239 = vsel %vm1223, %v1215, %v1231
    %v1240 = vsel %vm1224, %v1216, %v1232
    %v1241 = vsel %vm1225, %v1217, %v1233
    %v1242 = vsel %vm1226, %v1218, %v1234
    %v1243 = vsel %vm1227, %v1219, %v1235
    %v1244 = vsel %vm1228, %v1220, %v1236
    %v1245 = vsel %vm304, %v1237, -inf
    %1246 = vmax.xlane.f32.xlu0 %v1245
    %v1247 = vpop.xlane.xlu0 %1246
    %v1248 = vsel %vm304, %v1238, -inf
    %1249 = vmax.xlane.f32.xlu0 %v1248
    %v1250 = vpop.xlane.xlu0 %1249
    %v1251 = vsel %vm304, %v1239, -inf
    %1252 = vmax.xlane.f32.xlu0 %v1251
    %v1253 = vpop.xlane.xlu0 %1252
    %v1254 = vsel %vm304, %v1240, -inf
    %1255 = vmax.xlane.f32.xlu0 %v1254
    %v1256 = vpop.xlane.xlu0 %1255
    %v1257 = vsel %vm304, %v1241, -inf
    %1258 = vmax.xlane.f32.xlu0 %v1257
    %v1259 = vpop.xlane.xlu0 %1258
    %v1260 = vsel %vm304, %v1242, -inf
    %1261 = vmax.xlane.f32.xlu0 %v1260
    %v1262 = vpop.xlane.xlu0 %1261
    %v1263 = vsel %vm304, %v1243, -inf
    %1264 = vmax.xlane.f32.xlu0 %v1263
    %v1265 = vpop.xlane.xlu0 %1264
    %v1266 = vsel %vm304, %v1244, -inf
    %1267 = vmax.xlane.f32.xlu0 %v1266
    %v1268 = vpop.xlane.xlu0 %1267
    %v1269 = vsub.f32 %v1237, %v1247
    %v1270 = vsub.f32 %v1238, %v1250
    %v1271 = vsub.f32 %v1239, %v1253
    %v1272 = vsub.f32 %v1240, %v1256
    %v1273 = vsub.f32 %v1241, %v1259
    %v1274 = vsub.f32 %v1242, %v1262
    %v1275 = vsub.f32 %v1243, %v1265
    %v1276 = vsub.f32 %v1244, %v1268
    %v1277 = vmul.f32 %v1269, 1.442695
    %v1278 = vpow.pop %v1277
    %v1279 = vmul.f32 %v1270, 1.442695
    %v1280 = vpow.pop %v1279
    %v1281 = vmul.f32 %v1271, 1.442695
    %v1282 = vpow.pop %v1281
    %v1283 = vmul.f32 %v1272, 1.442695
    %v1284 = vpow.pop %v1283
    %v1285 = vmul.f32 %v1273, 1.442695
    %v1286 = vpow.pop %v1285
    %v1287 = vmul.f32 %v1274, 1.442695
    %v1288 = vpow.pop %v1287
    %v1289 = vmul.f32 %v1275, 1.442695
    %v1290 = vpow.pop %v1289
    %v1291 = vmul.f32 %v1276, 1.442695
    %v1292 = vpow.pop %v1291
    %v1293 = vmul.f32 %v1278, %v39
    %v1294 = vmul.f32 %v1280, %v40
    %v1295 = vmul.f32 %v1282, %v41
    %v1296 = vmul.f32 %v1284, %v42
    %v1297 = vmul.f32 %v1286, %v43
    %v1298 = vmul.f32 %v1288, %v44
    %v1299 = vmul.f32 %v1290, %v45
    %v1300 = vmul.f32 %v1292, %v46
    %v1301 = vsel %vm304, %v1293, 0.0
    %1302 = vadd.xlane.f32.xlu0 %v1301
    %v1303 = vpop.xlane.xlu0 %1302
    %v1304 = vsel %vm304, %v1294, 0.0
    %1305 = vadd.xlane.f32.xlu0 %v1304
    %v1306 = vpop.xlane.xlu0 %1305
    %v1307 = vsel %vm304, %v1295, 0.0
    %1308 = vadd.xlane.f32.xlu0 %v1307
    %v1309 = vpop.xlane.xlu0 %1308
    %v1310 = vsel %vm304, %v1296, 0.0
    %1311 = vadd.xlane.f32.xlu0 %v1310
    %v1312 = vpop.xlane.xlu0 %1311
    %v1313 = vsel %vm304, %v1297, 0.0
    %1314 = vadd.xlane.f32.xlu0 %v1313
    %v1315 = vpop.xlane.xlu0 %1314
    %v1316 = vsel %vm304, %v1298, 0.0
    %1317 = vadd.xlane.f32.xlu0 %v1316
    %v1318 = vpop.xlane.xlu0 %1317
    %v1319 = vsel %vm304, %v1299, 0.0
    %1320 = vadd.xlane.f32.xlu0 %v1319
    %v1321 = vpop.xlane.xlu0 %1320
    %v1322 = vsel %vm304, %v1300, 0.0
    %1323 = vadd.xlane.f32.xlu0 %v1322
    %v1324 = vpop.xlane.xlu0 %1323
    %v1325 = vrcp.pop %v1303
    %v1326 = vrcp.pop %v1306
    %v1327 = vrcp.pop %v1309
    %v1328 = vrcp.pop %v1312
    %v1329 = vrcp.pop %v1315
    %v1330 = vrcp.pop %v1318
    %v1331 = vrcp.pop %v1321
    %v1332 = vrcp.pop %v1324
    %v1333 = vmul.f32 %v1293, %v1325
    %v1334 = vmul.f32 %v1294, %v1326
    %v1335 = vmul.f32 %v1295, %v1327
    %v1336 = vmul.f32 %v1296, %v1328
    %v1337 = vmul.f32 %v1297, %v1329
    %v1338 = vmul.f32 %v1298, %v1330
    %v1339 = vmul.f32 %v1299, %v1331
    %v1340 = vmul.f32 %v1300, %v1332
    %v1341 = vpack.c.bf16 %v1334, %v1333
    %v1342 = vpack.c.bf16 %v1336, %v1335
    %v1343 = vpack.c.bf16 %v1338, %v1337
    %v1344 = vpack.c.bf16 %v1340, %v1339
    %v1345 = vpack.c.bf16 %v1076, %v1073
    %v1346 = vpack.c.bf16 %v1084, %v1081
    %v1347 = vpack.c.bf16 %v1092, %v1089
    %v1348 = vpack.c.bf16 %v1100, %v1097
    %1357 = vrot.lane.b32.xlu0 %v1108, 96
    %v1358 = vpop.permute.xlu0 %1357
    %1359 = vrot.lane.b32.xlu0 %v1109, 96
    %v1360 = vpop.permute.xlu0 %1359
    %1361 = vrot.lane.b32.xlu0 %v1110, 96
    %v1362 = vpop.permute.xlu0 %1361
    %1363 = vrot.lane.b32.xlu0 %v1111, 96
    %v1364 = vpop.permute.xlu0 %1363
    %1365 = vrot.lane.b32.xlu0 %v1112, 96
    %v1366 = vpop.permute.xlu0 %1365
    %1367 = vrot.lane.b32.xlu0 %v1113, 96
    %v1368 = vpop.permute.xlu0 %1367
    %1369 = vrot.lane.b32.xlu0 %v1114, 96
    %v1370 = vpop.permute.xlu0 %1369
    %1371 = vrot.lane.b32.xlu0 %v1115, 96
    %v1372 = vpop.permute.xlu0 %1371
    %v1381 = vsel %vm187, %v1358, 0.0
    %1382 = vadd.xlane.f32.xlu0 %v1381
    %v1383 = vpop.xlane.xlu0 %1382
    %v1384 = vsel %vm187, %v1360, 0.0
    %1385 = vadd.xlane.f32.xlu0 %v1384
    %v1386 = vpop.xlane.xlu0 %1385
    %v1387 = vsel %vm187, %v1362, 0.0
    %1388 = vadd.xlane.f32.xlu0 %v1387
    %v1389 = vpop.xlane.xlu0 %1388
    %v1390 = vsel %vm187, %v1364, 0.0
    %1391 = vadd.xlane.f32.xlu0 %v1390
    %v1392 = vpop.xlane.xlu0 %1391
    %v1393 = vsel %vm187, %v1366, 0.0
    %1394 = vadd.xlane.f32.xlu0 %v1393
    %v1395 = vpop.xlane.xlu0 %1394
    %v1396 = vsel %vm187, %v1368, 0.0
    %1397 = vadd.xlane.f32.xlu0 %v1396
    %v1398 = vpop.xlane.xlu0 %1397
    %v1399 = vsel %vm187, %v1370, 0.0
    %1400 = vadd.xlane.f32.xlu0 %v1399
    %v1401 = vpop.xlane.xlu0 %1400
    %v1402 = vsel %vm187, %v1372, 0.0
    %1403 = vadd.xlane.f32.xlu0 %v1402
    %v1404 = vpop.xlane.xlu0 %1403
    %1413 = vrot.lane.b32.xlu0 %v1121, 96
    %v1414 = vpop.permute.xlu0 %1413
    %1415 = vrot.lane.b32.xlu0 %v1122, 96
    %v1416 = vpop.permute.xlu0 %1415
    %1417 = vrot.lane.b32.xlu0 %v1123, 96
    %v1418 = vpop.permute.xlu0 %1417
    %1419 = vrot.lane.b32.xlu0 %v1124, 96
    %v1420 = vpop.permute.xlu0 %1419
    %1421 = vrot.lane.b32.xlu0 %v1125, 96
    %v1422 = vpop.permute.xlu0 %1421
    %1423 = vrot.lane.b32.xlu0 %v1126, 96
    %v1424 = vpop.permute.xlu0 %1423
    %1425 = vrot.lane.b32.xlu0 %v1127, 96
    %v1426 = vpop.permute.xlu0 %1425
    %1427 = vrot.lane.b32.xlu0 %v1128, 96
    %v1428 = vpop.permute.xlu0 %1427
    %v1437 = vsel %vm187, %v1414, 0.0
    %1438 = vadd.xlane.f32.xlu0 %v1437
    %v1439 = vpop.xlane.xlu0 %1438
    %v1440 = vsel %vm187, %v1416, 0.0
    %1441 = vadd.xlane.f32.xlu0 %v1440
    %v1442 = vpop.xlane.xlu0 %1441
    %v1443 = vsel %vm187, %v1418, 0.0
    %1444 = vadd.xlane.f32.xlu0 %v1443
    %v1445 = vpop.xlane.xlu0 %1444
    %v1446 = vsel %vm187, %v1420, 0.0
    %1447 = vadd.xlane.f32.xlu0 %v1446
    %v1448 = vpop.xlane.xlu0 %1447
    %v1449 = vsel %vm187, %v1422, 0.0
    %1450 = vadd.xlane.f32.xlu0 %v1449
    %v1451 = vpop.xlane.xlu0 %1450
    %v1452 = vsel %vm187, %v1424, 0.0
    %1453 = vadd.xlane.f32.xlu0 %v1452
    %v1454 = vpop.xlane.xlu0 %1453
    %v1455 = vsel %vm187, %v1426, 0.0
    %1456 = vadd.xlane.f32.xlu0 %v1455
    %v1457 = vpop.xlane.xlu0 %1456
    %v1458 = vsel %vm187, %v1428, 0.0
    %1459 = vadd.xlane.f32.xlu0 %v1458
    %v1460 = vpop.xlane.xlu0 %1459
    %1461 = vxpose.xlu0.b32.start [1/16] %v1383, 128
    %1462 = vxpose.xlu0.b32.cont [2/16] %v1386, 128
    %1463 = vxpose.xlu0.b32.cont [3/16] %v1389, 128
    %1464 = vxpose.xlu0.b32.cont [4/16] %v1392, 128
    %1465 = vxpose.xlu0.b32.cont [5/16] %v1395, 128
    %1466 = vxpose.xlu0.b32.cont [6/16] %v1398, 128
    %1467 = vxpose.xlu0.b32.cont [7/16] %v1401, 128
    %1468 = vxpose.xlu0.b32.cont [8/16] %v1404, 128
    %1469 = vxpose.xlu0.b32.cont [9/16] 0.0, 128
    %1470 = vxpose.xlu0.b32.cont [10/16] 0.0, 128
    %1471 = vxpose.xlu0.b32.cont [11/16] 0.0, 128
    %1472 = vxpose.xlu0.b32.cont [12/16] 0.0, 128
    %1473 = vxpose.xlu0.b32.cont [13/16] 0.0, 128
    %1474 = vxpose.xlu0.b32.cont [14/16] 0.0, 128
    %1475 = vxpose.xlu0.b32.cont [15/16] 0.0, 128
    %1476 = vxpose.xlu0.b32.end [16/16] 0.0, 128
    %v1477 = vpop.trf.xlu0
    %v1478 = vpop.trf.xlu0
    %v1479 = vpop.trf.xlu0
    %v1480 = vpop.trf.xlu0
    %v1481 = vpop.trf.xlu0
    %v1482 = vpop.trf.xlu0
    %v1483 = vpop.trf.xlu0
    %v1484 = vpop.trf.xlu0
    %v1485 = vpop.trf.xlu0
    %v1486 = vpop.trf.xlu0
    %v1487 = vpop.trf.xlu0
    %v1488 = vpop.trf.xlu0
    %v1489 = vpop.trf.xlu0
    %v1490 = vpop.trf.xlu0
    %v1491 = vpop.trf.xlu0
    %v1492 = vpop.trf.xlu0
    %v1493 = vlaneseq
    %v1494 = vshrl.u32 %v1493, 7
    %v1495 = vsub.s32 0, %v1494
    %v1496 = vrot.slane %v1477, %v1495
    %v1497 = vadd.f32 %v1439, %v1496
    %v1498 = vadd.f32 %v1442, %v1496
    %v1499 = vadd.f32 %v1445, %v1496
    %v1500 = vadd.f32 %v1448, %v1496
    %v1501 = vadd.f32 %v1451, %v1496
    %v1502 = vadd.f32 %v1454, %v1496
    %v1503 = vadd.f32 %v1457, %v1496
    %v1504 = vadd.f32 %v1460, %v1496
    %vm1505 = vcmp.gt.f32.partialorder %v1497, 0.0
    %vm1506 = vcmp.gt.f32.partialorder %v1498, 0.0
    %vm1507 = vcmp.gt.f32.partialorder %v1499, 0.0
    %vm1508 = vcmp.gt.f32.partialorder %v1500, 0.0
    %vm1509 = vcmp.gt.f32.partialorder %v1501, 0.0
    %vm1510 = vcmp.gt.f32.partialorder %v1502, 0.0
    %vm1511 = vcmp.gt.f32.partialorder %v1503, 0.0
    %vm1512 = vcmp.gt.f32.partialorder %v1504, 0.0
    %v1513 = vmul.f32 %v1497, 0.2
    %v1514 = vmul.f32 %v1498, 0.2
    %v1515 = vmul.f32 %v1499, 0.2
    %v1516 = vmul.f32 %v1500, 0.2
    %v1517 = vmul.f32 %v1501, 0.2
    %v1518 = vmul.f32 %v1502, 0.2
    %v1519 = vmul.f32 %v1503, 0.2
    %v1520 = vmul.f32 %v1504, 0.2
    %v1521 = vsel %vm1505, %v1497, %v1513
    %v1522 = vsel %vm1506, %v1498, %v1514
    %v1523 = vsel %vm1507, %v1499, %v1515
    %v1524 = vsel %vm1508, %v1500, %v1516
    %v1525 = vsel %vm1509, %v1501, %v1517
    %v1526 = vsel %vm1510, %v1502, %v1518
    %v1527 = vsel %vm1511, %v1503, %v1519
    %v1528 = vsel %vm1512, %v1504, %v1520
    %v1529 = vsel %vm304, %v1521, -inf
    %1530 = vmax.xlane.f32.xlu0 %v1529
    %v1531 = vpop.xlane.xlu0 %1530
    %v1532 = vsel %vm304, %v1522, -inf
    %1533 = vmax.xlane.f32.xlu0 %v1532
    %v1534 = vpop.xlane.xlu0 %1533
    %v1535 = vsel %vm304, %v1523, -inf
    %1536 = vmax.xlane.f32.xlu0 %v1535
    %v1537 = vpop.xlane.xlu0 %1536
    %v1538 = vsel %vm304, %v1524, -inf
    %1539 = vmax.xlane.f32.xlu0 %v1538
    %v1540 = vpop.xlane.xlu0 %1539
    %v1541 = vsel %vm304, %v1525, -inf
    %1542 = vmax.xlane.f32.xlu0 %v1541
    %v1543 = vpop.xlane.xlu0 %1542
    %v1544 = vsel %vm304, %v1526, -inf
    %1545 = vmax.xlane.f32.xlu0 %v1544
    %v1546 = vpop.xlane.xlu0 %1545
    %v1547 = vsel %vm304, %v1527, -inf
    %1548 = vmax.xlane.f32.xlu0 %v1547
    %v1549 = vpop.xlane.xlu0 %1548
    %v1550 = vsel %vm304, %v1528, -inf
    %1551 = vmax.xlane.f32.xlu0 %v1550
    %v1552 = vpop.xlane.xlu0 %1551
    %v1553 = vsub.f32 %v1521, %v1531
    %v1554 = vsub.f32 %v1522, %v1534
    %v1555 = vsub.f32 %v1523, %v1537
    %v1556 = vsub.f32 %v1524, %v1540
    %v1557 = vsub.f32 %v1525, %v1543
    %v1558 = vsub.f32 %v1526, %v1546
    %v1559 = vsub.f32 %v1527, %v1549
    %v1560 = vsub.f32 %v1528, %v1552
    %v1561 = vmul.f32 %v1553, 1.442695
    %v1562 = vpow.pop %v1561
    %v1563 = vmul.f32 %v1554, 1.442695
    %v1564 = vpow.pop %v1563
    %v1565 = vmul.f32 %v1555, 1.442695
    %v1566 = vpow.pop %v1565
    %v1567 = vmul.f32 %v1556, 1.442695
    %v1568 = vpow.pop %v1567
    %v1569 = vmul.f32 %v1557, 1.442695
    %v1570 = vpow.pop %v1569
    %v1571 = vmul.f32 %v1558, 1.442695
    %v1572 = vpow.pop %v1571
    %v1573 = vmul.f32 %v1559, 1.442695
    %v1574 = vpow.pop %v1573
    %v1575 = vmul.f32 %v1560, 1.442695
    %v1576 = vpow.pop %v1575
    %v1577 = vmul.f32 %v1562, %v39
    %v1578 = vmul.f32 %v1564, %v40
    %v1579 = vmul.f32 %v1566, %v41
    %v1580 = vmul.f32 %v1568, %v42
    %v1581 = vmul.f32 %v1570, %v43
    %v1582 = vmul.f32 %v1572, %v44
    %v1583 = vmul.f32 %v1574, %v45
    %v1584 = vmul.f32 %v1576, %v46
    %v1585 = vsel %vm304, %v1577, 0.0
    %1586 = vadd.xlane.f32.xlu0 %v1585
    %v1587 = vpop.xlane.xlu0 %1586
    %v1588 = vsel %vm304, %v1578, 0.0
    %1589 = vadd.xlane.f32.xlu0 %v1588
    %v1590 = vpop.xlane.xlu0 %1589
    %v1591 = vsel %vm304, %v1579, 0.0
    %1592 = vadd.xlane.f32.xlu0 %v1591
    %v1593 = vpop.xlane.xlu0 %1592
    %v1594 = vsel %vm304, %v1580, 0.0
    %1595 = vadd.xlane.f32.xlu0 %v1594
    %v1596 = vpop.xlane.xlu0 %1595
    %v1597 = vsel %vm304, %v1581, 0.0
    %1598 = vadd.xlane.f32.xlu0 %v1597
    %v1599 = vpop.xlane.xlu0 %1598
    %v1600 = vsel %vm304, %v1582, 0.0
    %1601 = vadd.xlane.f32.xlu0 %v1600
    %v1602 = vpop.xlane.xlu0 %1601
    %v1603 = vsel %vm304, %v1583, 0.0
    %1604 = vadd.xlane.f32.xlu0 %v1603
    %v1605 = vpop.xlane.xlu0 %1604
    %v1606 = vsel %vm304, %v1584, 0.0
    %1607 = vadd.xlane.f32.xlu0 %v1606
    %v1608 = vpop.xlane.xlu0 %1607
    %v1609 = vrcp.pop %v1587
    %v1610 = vrcp.pop %v1590
    %v1611 = vrcp.pop %v1593
    %v1612 = vrcp.pop %v1596
    %v1613 = vrcp.pop %v1599
    %v1614 = vrcp.pop %v1602
    %v1615 = vrcp.pop %v1605
    %v1616 = vrcp.pop %v1608
    %v1617 = vmul.f32 %v1577, %v1609
    %v1618 = vmul.f32 %v1578, %v1610
    %v1619 = vmul.f32 %v1579, %v1611
    %v1620 = vmul.f32 %v1580, %v1612
    %v1621 = vmul.f32 %v1581, %v1613
    %v1622 = vmul.f32 %v1582, %v1614
    %v1623 = vmul.f32 %v1583, %v1615
    %v1624 = vmul.f32 %v1584, %v1616
    %v1625 = vpack.c.bf16 %v1618, %v1617
    %v1626 = vpack.c.bf16 %v1620, %v1619
    %v1627 = vpack.c.bf16 %v1622, %v1621
    %v1628 = vpack.c.bf16 %v1624, %v1623
    %1633 = vrot.lane.b32.xlu0 %v1345, 96
    %v1634 = vpop.permute.xlu0 %1633
    %1635 = vrot.lane.b32.xlu0 %v1346, 96
    %v1636 = vpop.permute.xlu0 %1635
    %1637 = vrot.lane.b32.xlu0 %v1347, 96
    %v1638 = vpop.permute.xlu0 %1637
    %1639 = vrot.lane.b32.xlu0 %v1348, 96
    %v1640 = vpop.permute.xlu0 %1639
    %v1646 = vsel %vm304, %v1625, 0
    %v1649 = vsel %vm304, %v1626, 0
    %v1652 = vsel %vm304, %v1627, 0
    %v1655 = vsel %vm304, %v1628, 0
    %1657 = vmatprep.subr.bf16.mxu0 0
    %1658 = vmatpush1.bf16.msra.mxu0 %v1634
    %1659 = vmatprep.subr.bf16.mxu0 0
    %1660 = vmatpush1.bf16.msra.mxu0 %v1636
    %1661 = vmatprep.subr.bf16.mxu0 0
    %1662 = vmatpush1.bf16.msra.mxu0 %v1638
    %1663 = vmatprep.subr.bf16.mxu0 0
    %1664 = vmatpush1.bf16.msra.mxu0 %v1640
    %1665 = vmatprep.subr.bf16.mxu0 0
    %1666 = vmatpush1.bf16.msra.mxu0 0
    %1667 = vmatprep.subr.bf16.mxu0 0
    %1668 = vmatpush1.bf16.msra.mxu0 0
    %1669 = vmatprep.subr.bf16.mxu0 0
    %1670 = vmatpush1.bf16.msra.mxu0 0
    %1671 = vmatprep.subr.bf16.mxu0 0
    %1672 = vmatpush1.bf16.msra.mxu0 0
    %1673 = vmatprep.subr.bf16.mxu0 0
    %1674 = vmatpush1.bf16.msra.mxu0 0
    %1675 = vmatprep.subr.bf16.mxu0 0
    %1676 = vmatpush1.bf16.msra.mxu0 0
    %1677 = vmatprep.subr.bf16.mxu0 0
    %1678 = vmatpush1.bf16.msra.mxu0 0
    %1679 = vmatprep.subr.bf16.mxu0 0
    %1680 = vmatpush1.bf16.msra.mxu0 0
    %1681 = vmatprep.subr.bf16.mxu0 0
    %1682 = vmatpush1.bf16.msra.mxu0 0
    %1683 = vmatprep.subr.bf16.mxu0 0
    %1684 = vmatpush1.bf16.msra.mxu0 0
    %1685 = vmatprep.subr.bf16.mxu0 0
    %1686 = vmatpush1.bf16.msra.mxu0 0
    %1687 = vmatprep.subr.bf16.mxu0 0
    %1688 = vmatpush1.bf16.msra.mxu0 0
    %1689 = vmatprep.mubr.bf16.mxu0 0
    %1690 = vmatmul.mubr.bf16.gmra.mrb[0].mxu0 %v1646
    %v1691 = vpop.f32.mrb[0].mxu0
    %v1692 = vadd.f32 0.0, %v1691
    %v1693 = vpop.f32.mrb[0].mxu0
    %v1694 = vpop.f32.mrb[0].mxu0
    %v1695 = vadd.f32 0.0, %v1694
    %v1696 = vpop.f32.mrb[0].mxu0
    %1697 = vmatprep.mubr.bf16.mxu0 0
    %1698 = vmatmul.mubr.bf16.gmra.mrb[0].mxu0 %v1649
    %v1699 = vpop.f32.mrb[0].mxu0
    %v1700 = vadd.f32 0.0, %v1699
    %v1701 = vpop.f32.mrb[0].mxu0
    %v1702 = vpop.f32.mrb[0].mxu0
    %v1703 = vadd.f32 0.0, %v1702
    %v1704 = vpop.f32.mrb[0].mxu0
    %1705 = vmatprep.mubr.bf16.mxu0 0
    %1706 = vmatmul.mubr.bf16.gmra.mrb[0].mxu0 %v1652
    %v1707 = vpop.f32.mrb[0].mxu0
    %v1708 = vadd.f32 0.0, %v1707
    %v1709 = vpop.f32.mrb[0].mxu0
    %v1710 = vpop.f32.mrb[0].mxu0
    %v1711 = vadd.f32 0.0, %v1710
    %v1712 = vpop.f32.mrb[0].mxu0
    %1713 = vmatprep.mubr.bf16.mxu0 0
    %1714 = vmatmul.mubr.bf16.gmra.mrb[0].mxu0 %v1655
    %v1715 = vpop.f32.mrb[0].mxu0
    %v1716 = vadd.f32 0.0, %v1715
    %v1717 = vpop.f32.mrb[0].mxu0
    %v1718 = vpop.f32.mrb[0].mxu0
    %v1719 = vadd.f32 0.0, %v1718
    %v1720 = vpop.f32.mrb[0].mxu0
    %1721 = vdwg.mxu0
    %v1723 = vsel %vm304, %v1341, 0
    %v1726 = vsel %vm304, %v1342, 0
    %v1729 = vsel %vm304, %v1343, 0
    %v1732 = vsel %vm304, %v1344, 0
    %1734 = vmatprep.subr.bf16.mxu0 0
    %1735 = vmatpush1.bf16.msra.mxu0 %v1345
    %1736 = vmatprep.subr.bf16.mxu0 0
    %1737 = vmatpush1.bf16.msra.mxu0 %v1346
    %1738 = vmatprep.subr.bf16.mxu0 0
    %1739 = vmatpush1.bf16.msra.mxu0 %v1347
    %1740 = vmatprep.subr.bf16.mxu0 0
    %1741 = vmatpush1.bf16.msra.mxu0 %v1348
    %1742 = vmatprep.subr.bf16.mxu0 0
    %1743 = vmatpush1.bf16.msra.mxu0 0
    %1744 = vmatprep.subr.bf16.mxu0 0
    %1745 = vmatpush1.bf16.msra.mxu0 0
    %1746 = vmatprep.subr.bf16.mxu0 0
    %1747 = vmatpush1.bf16.msra.mxu0 0
    %1748 = vmatprep.subr.bf16.mxu0 0
    %1749 = vmatpush1.bf16.msra.mxu0 0
    %1750 = vmatprep.subr.bf16.mxu0 0
    %1751 = vmatpush1.bf16.msra.mxu0 0
    %1752 = vmatprep.subr.bf16.mxu0 0
    %1753 = vmatpush1.bf16.msra.mxu0 0
    %1754 = vmatprep.subr.bf16.mxu0 0
    %1755 = vmatpush1.bf16.msra.mxu0 0
    %1756 = vmatprep.subr.bf16.mxu0 0
    %1757 = vmatpush1.bf16.msra.mxu0 0
    %1758 = vmatprep.subr.bf16.mxu0 0
    %1759 = vmatpush1.bf16.msra.mxu0 0
    %1760 = vmatprep.subr.bf16.mxu0 0
    %1761 = vmatpush1.bf16.msra.mxu0 0
    %1762 = vmatprep.subr.bf16.mxu0 0
    %1763 = vmatpush1.bf16.msra.mxu0 0
    %1764 = vmatprep.subr.bf16.mxu0 0
    %1765 = vmatpush1.bf16.msra.mxu0 0
    %1766 = vmatprep.mubr.bf16.mxu0 0
    %1767 = vmatmul.mubr.bf16.gmra.mrb[0].mxu0 %v1723
    %v1768 = vpop.f32.mrb[0].mxu0
    %v1769 = vadd.f32 %v1692, %v1768
    %v1770 = vpop.f32.mrb[0].mxu0
    %v1771 = vpop.f32.mrb[0].mxu0
    %v1772 = vadd.f32 %v1695, %v1771
    %v1773 = vpop.f32.mrb[0].mxu0
    %1774 = vmatprep.mubr.bf16.mxu0 0
    %1775 = vmatmul.mubr.bf16.gmra.mrb[0].mxu0 %v1726
    %v1776 = vpop.f32.mrb[0].mxu0
    %v1777 = vadd.f32 %v1700, %v1776
    %v1778 = vpop.f32.mrb[0].mxu0
    %v1779 = vpop.f32.mrb[0].mxu0
    %v1780 = vadd.f32 %v1703, %v1779
    %v1781 = vpop.f32.mrb[0].mxu0
    %1782 = vmatprep.mubr.bf16.mxu0 0
    %1783 = vmatmul.mubr.bf16.gmra.mrb[0].mxu0 %v1729
    %v1784 = vpop.f32.mrb[0].mxu0
    %v1785 = vadd.f32 %v1708, %v1784
    %v1786 = vpop.f32.mrb[0].mxu0
    %v1787 = vpop.f32.mrb[0].mxu0
    %v1788 = vadd.f32 %v1711, %v1787
    %v1789 = vpop.f32.mrb[0].mxu0
    %1790 = vmatprep.mubr.bf16.mxu0 0
    %1791 = vmatmul.mubr.bf16.gmra.mrb[0].mxu0 %v1732
    %v1792 = vpop.f32.mrb[0].mxu0
    %v1793 = vadd.f32 %v1716, %v1792
    %v1794 = vpop.f32.mrb[0].mxu0
    %v1795 = vpop.f32.mrb[0].mxu0
    %v1796 = vadd.f32 %v1719, %v1795
    %v1797 = vpop.f32.mrb[0].mxu0
    %1798 = vdwg.mxu0
    %v1799 = vld [vmem:[%s2 + $0x6] sm:$0x1]
    %v1800 = vlaneseq
    %v1801 = vshrl.u32 %v1800, 7
    %v1802 = vsub.s32 0, %v1801
    %v1803 = vrot.slane %v1799, %v1802
    %v1804 = vmul.f32 %v1769, %v1803
    %v1805 = vmul.f32 %v1772, %v1803
    %v1806 = vmul.f32 %v1777, %v1803
    %v1807 = vmul.f32 %v1780, %v1803
    %v1808 = vmul.f32 %v1785, %v1803
    %v1809 = vmul.f32 %v1788, %v1803
    %v1810 = vmul.f32 %v1793, %v1803
    %v1811 = vmul.f32 %v1796, %v1803
    %v1812 = vld [vmem:[%s2 + $0x8] sm:$0x1]
    %v1813 = vlaneseq
    %v1814 = vshrl.u32 %v1813, 7
    %v1815 = vsub.s32 0, %v1814
    %v1816 = vrot.slane %v1812, %v1815
    %v1817 = vadd.f32 %v1804, %v1816
    %v1818 = vadd.f32 %v1805, %v1816
    %v1819 = vadd.f32 %v1806, %v1816
    %v1820 = vadd.f32 %v1807, %v1816
    %v1821 = vadd.f32 %v1808, %v1816
    %v1822 = vadd.f32 %v1809, %v1816
    %v1823 = vadd.f32 %v1810, %v1816
    %v1824 = vadd.f32 %v1811, %v1816
    %v1825 = vld [vmem:[%s2 + $0x7] sm:$0x1]
    %v1826 = vlaneseq
    %v1827 = vshrl.u32 %v1826, 7
    %v1828 = vsub.s32 0, %v1827
    %v1829 = vrot.slane %v1825, %v1828
    %v1830 = vmul.f32 %v998, %v1829
    %v1831 = vmul.f32 %v999, %v1829
    %v1832 = vmul.f32 %v1000, %v1829
    %v1833 = vmul.f32 %v1001, %v1829
    %v1834 = vmul.f32 %v1002, %v1829
    %v1835 = vmul.f32 %v1003, %v1829
    %v1836 = vmul.f32 %v1004, %v1829
    %v1837 = vmul.f32 %v1005, %v1829
    %v1838 = vadd.f32 %v1817, %v1830
    %v1839 = vadd.f32 %v1818, %v1831
    %v1840 = vadd.f32 %v1819, %v1832
    %v1841 = vadd.f32 %v1820, %v1833
    %v1842 = vadd.f32 %v1821, %v1834
    %v1843 = vadd.f32 %v1822, %v1835
    %v1844 = vadd.f32 %v1823, %v1836
    %v1845 = vadd.f32 %v1824, %v1837
    %vm1846 = vcmp.gt.f32.partialorder %v1838, 0.0
    %vm1847 = vcmp.gt.f32.partialorder %v1839, 0.0
    %vm1848 = vcmp.gt.f32.partialorder %v1840, 0.0
    %vm1849 = vcmp.gt.f32.partialorder %v1841, 0.0
    %vm1850 = vcmp.gt.f32.partialorder %v1842, 0.0
    %vm1851 = vcmp.gt.f32.partialorder %v1843, 0.0
    %vm1852 = vcmp.gt.f32.partialorder %v1844, 0.0
    %vm1853 = vcmp.gt.f32.partialorder %v1845, 0.0
    %v1854 = vmul.f32 %v1838, 1.442695
    %v1855 = vpow.pop %v1854
    %v1856 = vmul.f32 %v1839, 1.442695
    %v1857 = vpow.pop %v1856
    %v1858 = vmul.f32 %v1840, 1.442695
    %v1859 = vpow.pop %v1858
    %v1860 = vmul.f32 %v1841, 1.442695
    %v1861 = vpow.pop %v1860
    %v1862 = vmul.f32 %v1842, 1.442695
    %v1863 = vpow.pop %v1862
    %v1864 = vmul.f32 %v1843, 1.442695
    %v1865 = vpow.pop %v1864
    %v1866 = vmul.f32 %v1844, 1.442695
    %v1867 = vpow.pop %v1866
    %v1868 = vmul.f32 %v1845, 1.442695
    %v1869 = vpow.pop %v1868
    %v1870 = vsub.f32 %v1855, 1.0
    %v1871 = vsub.f32 %v1857, 1.0
    %v1872 = vsub.f32 %v1859, 1.0
    %v1873 = vsub.f32 %v1861, 1.0
    %v1874 = vsub.f32 %v1863, 1.0
    %v1875 = vsub.f32 %v1865, 1.0
    %v1876 = vsub.f32 %v1867, 1.0
    %v1877 = vsub.f32 %v1869, 1.0
    %v1878 = vsel %vm1846, %v1838, %v1870
    %v1879 = vsel %vm1847, %v1839, %v1871
    %v1880 = vsel %vm1848, %v1840, %v1872
    %v1881 = vsel %vm1849, %v1841, %v1873
    %v1882 = vsel %vm1850, %v1842, %v1874
    %v1883 = vsel %vm1851, %v1843, %v1875
    %v1884 = vsel %vm1852, %v1844, %v1876
    %v1885 = vsel %vm1853, %v1845, %v1877
    %1886 = vst [vmem:[#allocation2] sm:$0xff] 0.0
    %1887 = vst [vmem:[#allocation2 + $0x8] sm:$0xff] 0.0
    %1888 = vst [vmem:[#allocation2 + $0x10] sm:$0xff] 0.0
    %1889 = vst [vmem:[#allocation2 + $0x18] sm:$0xff] 0.0
    %1890 = vst [vmem:[#allocation2 + $0x20] sm:$0xff] 0.0
    %1891 = vst [vmem:[#allocation2 + $0x28] sm:$0xff] 0.0
    %1892 = vst [vmem:[#allocation2 + $0x30] sm:$0xff] 0.0
    %1893 = vst [vmem:[#allocation2 + $0x38] sm:$0xff] 0.0
    %1894 = vst [vmem:[#allocation2 + $0x40] sm:$0xff] 0.0
    %1895 = vst [vmem:[#allocation2 + $0x48] sm:$0xff] 0.0
    %1896 = vst [vmem:[#allocation2 + $0x50] sm:$0xff] 0.0
    %1897 = vst [vmem:[#allocation2 + $0x58] sm:$0xff] 0.0
    %1898 = vst [vmem:[#allocation2 + $0x60] sm:$0xff] 0.0
    %1899 = vst [vmem:[#allocation2 + $0x68] sm:$0xff] 0.0
    %1900 = vst [vmem:[#allocation2 + $0x70] sm:$0xff] 0.0
    %1901 = vst [vmem:[#allocation2 + $0x78] sm:$0xff] 0.0
    %v1902 = vld [vmem:[%s6] sm:$0xf]
    %v1903 = vld [vmem:[%s6 + $0x4] sm:$0xf]
    %v1904 = vld [vmem:[%s6 + $0x8] sm:$0xf]
    %v1905 = vld [vmem:[%s6 + $0xc] sm:$0xf]
    %v1906 = vpack.c.bf16 %v1879, %v1878
    %v1907 = vpack.c.bf16 %v1881, %v1880
    %v1908 = vpack.c.bf16 %v1883, %v1882
    %v1909 = vpack.c.bf16 %v1885, %v1884
    %v1910 = vld [vmem:[%s2 + $0x9] sm:$0x1]
    %v1911 = vlaneseq
    %v1912 = vshrl.u32 %v1911, 7
    %v1913 = vsub.s32 0, %v1912
    %v1914 = vrot.slane %v1910, %v1913
    %v1919 = vunpack.c.l.b16 %v1902
    %v1920 = vunpack.c.l.b16 %v1903
    %v1921 = vunpack.c.l.b16 %v1904
    %v1922 = vunpack.c.l.b16 %v1905
    %v1923 = vpack.c.b16 %v1920, %v1919
    %v1924 = vpack.c.b16 %v1922, %v1921
    %v1928 = vsel %vm187, %v1906, 0
    %v1931 = vsel %vm187, %v1907, 0
    %v1934 = vsel %vm187, %v1908, 0
    %v1937 = vsel %vm187, %v1909, 0
    %1939 = vmatprep.subr.bf16.mxu0 0
    %1940 = vmatpush1.bf16.msra.mxu0 %v1923
    %1941 = vmatprep.subr.bf16.mxu0 0
    %1942 = vmatpush1.bf16.msra.mxu0 %v1924
    %1943 = vmatprep.subr.bf16.mxu0 0
    %1944 = vmatpush1.bf16.msra.mxu0 0
    %1945 = vmatprep.subr.bf16.mxu0 0
    %1946 = vmatpush1.bf16.msra.mxu0 0
    %1947 = vmatprep.subr.bf16.mxu0 0
    %1948 = vmatpush1.bf16.msra.mxu0 0
    %1949 = vmatprep.subr.bf16.mxu0 0
    %1950 = vmatpush1.bf16.msra.mxu0 0
    %1951 = vmatprep.subr.bf16.mxu0 0
    %1952 = vmatpush1.bf16.msra.mxu0 0
    %1953 = vmatprep.subr.bf16.mxu0 0
    %1954 = vmatpush1.bf16.msra.mxu0 0
    %1955 = vmatprep.subr.bf16.mxu0 0
    %1956 = vmatpush1.bf16.msra.mxu0 0
    %1957 = vmatprep.subr.bf16.mxu0 0
    %1958 = vmatpush1.bf16.msra.mxu0 0
    %1959 = vmatprep.subr.bf16.mxu0 0
    %1960 = vmatpush1.bf16.msra.mxu0 0
    %1961 = vmatprep.subr.bf16.mxu0 0
    %1962 = vmatpush1.bf16.msra.mxu0 0
    %1963 = vmatprep.subr.bf16.mxu0 0
    %1964 = vmatpush1.bf16.msra.mxu0 0
    %1965 = vmatprep.subr.bf16.mxu0 0
    %1966 = vmatpush1.bf16.msra.mxu0 0
    %1967 = vmatprep.subr.bf16.mxu0 0
    %1968 = vmatpush1.bf16.msra.mxu0 0
    %1969 = vmatprep.subr.bf16.mxu0 0
    %1970 = vmatpush1.bf16.msra.mxu0 0
    %1971 = vmatprep.mubr.bf16.mxu0 0
    %1972 = vmatmul.mubr.bf16.gmra.mrb[0].mxu0 %v1928
    %v1973 = vpop.f32.mrb[0].mxu0
    %v1974 = vadd.f32 %v1914, %v1973
    %v1975 = vpop.f32.mrb[0].mxu0
    %v1976 = vpop.f32.mrb[0].mxu0
    %v1977 = vadd.f32 %v1914, %v1976
    %v1978 = vpop.f32.mrb[0].mxu0
    %1979 = vmatprep.mubr.bf16.mxu0 0
    %1980 = vmatmul.mubr.bf16.gmra.mrb[0].mxu0 %v1931
    %v1981 = vpop.f32.mrb[0].mxu0
    %v1982 = vadd.f32 %v1914, %v1981
    %v1983 = vpop.f32.mrb[0].mxu0
    %v1984 = vpop.f32.mrb[0].mxu0
    %v1985 = vadd.f32 %v1914, %v1984
    %v1986 = vpop.f32.mrb[0].mxu0
    %1987 = vmatprep.mubr.bf16.mxu0 0
    %1988 = vmatmul.mubr.bf16.gmra.mrb[0].mxu0 %v1934
    %v1989 = vpop.f32.mrb[0].mxu0
    %v1990 = vadd.f32 %v1914, %v1989
    %v1991 = vpop.f32.mrb[0].mxu0
    %v1992 = vpop.f32.mrb[0].mxu0
    %v1993 = vadd.f32 %v1914, %v1992
    %v1994 = vpop.f32.mrb[0].mxu0
    %1995 = vmatprep.mubr.bf16.mxu0 0
    %1996 = vmatmul.mubr.bf16.gmra.mrb[0].mxu0 %v1937
    %v1997 = vpop.f32.mrb[0].mxu0
    %v1998 = vadd.f32 %v1914, %v1997
    %v1999 = vpop.f32.mrb[0].mxu0
    %v2000 = vpop.f32.mrb[0].mxu0
    %v2001 = vadd.f32 %v1914, %v2000
    %v2002 = vpop.f32.mrb[0].mxu0
    %2003 = vdwg.mxu0
    %vm2004 = vcmask 64512
    %2005 = vst.msk [vmem:[#allocation2] sm:$0xff] %vm2004, %v1974
    %2006 = vst.msk [vmem:[#allocation2 + $0x10] sm:$0xff] %vm2004, %v1977
    %2007 = vst.msk [vmem:[#allocation2 + $0x20] sm:$0xff] %vm2004, %v1982
    %2008 = vst.msk [vmem:[#allocation2 + $0x30] sm:$0xff] %vm2004, %v1985
    %2009 = vst.msk [vmem:[#allocation2 + $0x40] sm:$0xff] %vm2004, %v1990
    %2010 = vst.msk [vmem:[#allocation2 + $0x50] sm:$0xff] %vm2004, %v1993
    %2011 = vst.msk [vmem:[#allocation2 + $0x60] sm:$0xff] %vm2004, %v1998
    %2012 = vst.msk [vmem:[#allocation2 + $0x70] sm:$0xff] %vm2004, %v2001
    %v2013 = vld [vmem:[%s7] sm:$0xf]
    %v2014 = vpack.c.bf16 %v1977, %v1974
    %v2015 = vpack.c.bf16 %v1985, %v1982
    %v2016 = vpack.c.bf16 %v1993, %v1990
    %v2017 = vpack.c.bf16 %v2001, %v1998
    %v2018 = vld [vmem:[%s2 + $0xa] sm:$0x1]
    %v2019 = vlaneseq
    %v2020 = vshrl.u32 %v2019, 7
    %v2021 = vsub.s32 0, %v2020
    %v2022 = vrot.slane %v2018, %v2021
    %v2024 = vsel %vm2004, %v2014, 0
    %v2027 = vsel %vm2004, %v2015, 0
    %v2030 = vsel %vm2004, %v2016, 0
    %v2033 = vsel %vm2004, %v2017, 0
    %vm2035 = vcmask 1043456
    %v2037 = vsel %vm2035, %v2013, 0
    %2039 = vmatprep.subr.bf16.mxu0 0
    %2040 = vmatpush1.bf16.msra.mxu0 %v2037
    %2041 = vmatprep.subr.bf16.mxu0 0
    %2042 = vmatpush1.bf16.msra.mxu0 0
    %2043 = vmatprep.subr.bf16.mxu0 0
    %2044 = vmatpush1.bf16.msra.mxu0 0
    %2045 = vmatprep.subr.bf16.mxu0 0
    %2046 = vmatpush1.bf16.msra.mxu0 0
    %2047 = vmatprep.subr.bf16.mxu0 0
    %2048 = vmatpush1.bf16.msra.mxu0 0
    %2049 = vmatprep.subr.bf16.mxu0 0
    %2050 = vmatpush1.bf16.msra.mxu0 0
    %2051 = vmatprep.subr.bf16.mxu0 0
    %2052 = vmatpush1.bf16.msra.mxu0 0
    %2053 = vmatprep.subr.bf16.mxu0 0
    %2054 = vmatpush1.bf16.msra.mxu0 0
    %2055 = vmatprep.subr.bf16.mxu0 0
    %2056 = vmatpush1.bf16.msra.mxu0 0
    %2057 = vmatprep.subr.bf16.mxu0 0
    %2058 = vmatpush1.bf16.msra.mxu0 0
    %2059 = vmatprep.subr.bf16.mxu0 0
    %2060 = vmatpush1.bf16.msra.mxu0 0
    %2061 = vmatprep.subr.bf16.mxu0 0
    %2062 = vmatpush1.bf16.msra.mxu0 0
    %2063 = vmatprep.subr.bf16.mxu0 0
    %2064 = vmatpush1.bf16.msra.mxu0 0
    %2065 = vmatprep.subr.bf16.mxu0 0
    %2066 = vmatpush1.bf16.msra.mxu0 0
    %2067 = vmatprep.subr.bf16.mxu0 0
    %2068 = vmatpush1.bf16.msra.mxu0 0
    %2069 = vmatprep.subr.bf16.mxu0 0
    %2070 = vmatpush1.bf16.msra.mxu0 0
    %2071 = vmatprep.mubr.bf16.mxu0 0
    %2072 = vmatmul.mubr.bf16.gmra.mrb[0].mxu0 %v2024
    %v2073 = vpop.f32.mrb[0].mxu0
    %v2074 = vadd.f32 %v2022, %v2073
    %v2075 = vpop.f32.mrb[0].mxu0
    %v2076 = vpop.f32.mrb[0].mxu0
    %v2077 = vadd.f32 %v2022, %v2076
    %v2078 = vpop.f32.mrb[0].mxu0
    %2079 = vmatprep.mubr.bf16.mxu0 0
    %2080 = vmatmul.mubr.bf16.gmra.mrb[0].mxu0 %v2027
    %v2081 = vpop.f32.mrb[0].mxu0
    %v2082 = vadd.f32 %v2022, %v2081
    %v2083 = vpop.f32.mrb[0].mxu0
    %v2084 = vpop.f32.mrb[0].mxu0
    %v2085 = vadd.f32 %v2022, %v2084
    %v2086 = vpop.f32.mrb[0].mxu0
    %2087 = vmatprep.mubr.bf16.mxu0 0
    %2088 = vmatmul.mubr.bf16.gmra.mrb[0].mxu0 %v2030
    %v2089 = vpop.f32.mrb[0].mxu0
    %v2090 = vadd.f32 %v2022, %v2089
    %v2091 = vpop.f32.mrb[0].mxu0
    %v2092 = vpop.f32.mrb[0].mxu0
    %v2093 = vadd.f32 %v2022, %v2092
    %v2094 = vpop.f32.mrb[0].mxu0
    %2095 = vmatprep.mubr.bf16.mxu0 0
    %2096 = vmatmul.mubr.bf16.gmra.mrb[0].mxu0 %v2033
    %v2097 = vpop.f32.mrb[0].mxu0
    %v2098 = vadd.f32 %v2022, %v2097
    %v2099 = vpop.f32.mrb[0].mxu0
    %v2100 = vpop.f32.mrb[0].mxu0
    %v2101 = vadd.f32 %v2022, %v2100
    %v2102 = vpop.f32.mrb[0].mxu0
    %2103 = vdwg.mxu0
    %vm2104 = vcmp.gt.f32.partialorder %v2074, 0.0
    %vm2105 = vcmp.gt.f32.partialorder %v2077, 0.0
    %vm2106 = vcmp.gt.f32.partialorder %v2082, 0.0
    %vm2107 = vcmp.gt.f32.partialorder %v2085, 0.0
    %vm2108 = vcmp.gt.f32.partialorder %v2090, 0.0
    %vm2109 = vcmp.gt.f32.partialorder %v2093, 0.0
    %vm2110 = vcmp.gt.f32.partialorder %v2098, 0.0
    %vm2111 = vcmp.gt.f32.partialorder %v2101, 0.0
    %v2112 = vmul.f32 %v2074, 1.442695
    %v2113 = vpow.pop %v2112
    %v2114 = vmul.f32 %v2077, 1.442695
    %v2115 = vpow.pop %v2114
    %v2116 = vmul.f32 %v2082, 1.442695
    %v2117 = vpow.pop %v2116
    %v2118 = vmul.f32 %v2085, 1.442695
    %v2119 = vpow.pop %v2118
    %v2120 = vmul.f32 %v2090, 1.442695
    %v2121 = vpow.pop %v2120
    %v2122 = vmul.f32 %v2093, 1.442695
    %v2123 = vpow.pop %v2122
    %v2124 = vmul.f32 %v2098, 1.442695
    %v2125 = vpow.pop %v2124
    %v2126 = vmul.f32 %v2101, 1.442695
    %v2127 = vpow.pop %v2126
    %v2128 = vsub.f32 %v2113, 1.0
    %v2129 = vsub.f32 %v2115, 1.0
    %v2130 = vsub.f32 %v2117, 1.0
    %v2131 = vsub.f32 %v2119, 1.0
    %v2132 = vsub.f32 %v2121, 1.0
    %v2133 = vsub.f32 %v2123, 1.0
    %v2134 = vsub.f32 %v2125, 1.0
    %v2135 = vsub.f32 %v2127, 1.0
    %v2136 = vsel %vm2104, %v2074, %v2128
    %v2137 = vsel %vm2105, %v2077, %v2129
    %v2138 = vsel %vm2106, %v2082, %v2130
    %v2139 = vsel %vm2107, %v2085, %v2131
    %v2140 = vsel %vm2108, %v2090, %v2132
    %v2141 = vsel %vm2109, %v2093, %v2133
    %v2142 = vsel %vm2110, %v2098, %v2134
    %v2143 = vsel %vm2111, %v2101, %v2135
    %v2144 = vld [vmem:[%s2 + $0xb] sm:$0x1]
    %v2145 = vlaneseq
    %v2146 = vshrl.u32 %v2145, 7
    %v2147 = vsub.s32 0, %v2146
    %v2148 = vrot.slane %v2144, %v2147
    %v2149 = vmul.f32 %v2136, %v2148
    %v2150 = vmul.f32 %v2137, %v2148
    %v2151 = vmul.f32 %v2138, %v2148
    %v2152 = vmul.f32 %v2139, %v2148
    %v2153 = vmul.f32 %v2140, %v2148
    %v2154 = vmul.f32 %v2141, %v2148
    %v2155 = vmul.f32 %v2142, %v2148
    %v2156 = vmul.f32 %v2143, %v2148
    %v2157 = vld [vmem:[%s2 + $0xc] sm:$0x1]
    %v2158 = vlaneseq
    %v2159 = vshrl.u32 %v2158, 7
    %v2160 = vsub.s32 0, %v2159
    %v2161 = vrot.slane %v2157, %v2160
    %v2162 = vadd.f32 %v2149, %v2161
    %v2163 = vadd.f32 %v2150, %v2161
    %v2164 = vadd.f32 %v2151, %v2161
    %v2165 = vadd.f32 %v2152, %v2161
    %v2166 = vadd.f32 %v2153, %v2161
    %v2167 = vadd.f32 %v2154, %v2161
    %v2168 = vadd.f32 %v2155, %v2161
    %v2169 = vadd.f32 %v2156, %v2161
    %vm2170 = vcmask 31744
    %2171 = vst.msk [vmem:[#allocation2 + $0x8] sm:$0xff] %vm2170, %v2162
    %2172 = vst.msk [vmem:[#allocation2 + $0x18] sm:$0xff] %vm2170, %v2163
    %2173 = vst.msk [vmem:[#allocation2 + $0x28] sm:$0xff] %vm2170, %v2164
    %2174 = vst.msk [vmem:[#allocation2 + $0x38] sm:$0xff] %vm2170, %v2165
    %2175 = vst.msk [vmem:[#allocation2 + $0x48] sm:$0xff] %vm2170, %v2166
    %2176 = vst.msk [vmem:[#allocation2 + $0x58] sm:$0xff] %vm2170, %v2167
    %2177 = vst.msk [vmem:[#allocation2 + $0x68] sm:$0xff] %vm2170, %v2168
    %2178 = vst.msk [vmem:[#allocation2 + $0x78] sm:$0xff] %vm2170, %v2169
    // Predicated region
    $region34: #{tpu_custom_call.1} parent=1 // pred_check
      _
    $region35: #{tpu_custom_call.1} parent=1 // pred_check_branch
      %2180 = sbr.rel (0) target = $region37
    $region36: #{tpu_custom_call.1} parent=1 // pred_region
      %s2182 = ssub.s32 2048, 2048
      %2183 = vsyncadd [#allocation3], %s2182
      %s2184 = sshll.u32 [#allocation2], 4
      %s2185 = int_to_ptr.vmem [resolvable:$true] %s2184
      %2190 = dma.vmem_to_hbm [thread:$0]  %s2185, 2048, %s8, [#allocation3], 256, 256, 16
    $region37: #{tpu_custom_call.1} parent=1 // pred_fallthru
      _
    // Predicated region
    $region38: #{tpu_custom_call.1} parent=1 // pred_check
      _
    $region39: #{tpu_custom_call.1} parent=1 // pred_check_branch
      %2192 = sbr.rel (0) target = $region41
    $region40: #{tpu_custom_call.1} parent=1 // pred_region
      %2193 = dma.done [#allocation3], 2048
    $region41: #{tpu_custom_call.1} parent=1 // pred_fallthru
      _
    %2194 = vsyncpa [#allocation3], 1

</llo_original>
